<compile_context>
chip_gen: v6e
topology: v6e:2x2x1
jax: 0.10.0
libtpu: 0.0.40
codegen_flags: <defaults>
</compile_context>

<pallas_src>
import functools

import jax
import jax.numpy as jnp
from jax.experimental import pallas as pl
from jax.experimental.pallas import tpu as pltpu


def _pick_block_n(n_pad, max_block=640):
    """Largest multiple-of-128 divisor of n_pad that is <= max_block."""
    if n_pad <= max_block:
        return n_pad
    best = 128
    for cand in range(256, max_block + 1, 128):
        if n_pad % cand == 0:
            best = cand
    return best


# ----------------------------------------------------------------------------
# Fused kernel: conv1x1+ReLU -> conv1x1+ReLU -> flatten -> Linear -> Sigmoid
# ----------------------------------------------------------------------------
def _fused_mynet_kernel(x_ref, w1_ref, b1_ref, w2_ref, b2_ref, wr_ref, br_ref,
                        o_ref, xf_ref, *, n_batch, hw, c_out):
    j = pl.program_id(0)

    # Feature stages run once; the flattened activations persist in VMEM
    # scratch across all regressor-column grid steps (grid axis is "arbitrary"
    # so this is sequential on one TensorCore).
    @pl.when(j == 0)
    def _build_features():
        h1 = jnp.dot(x_ref[...], w1_ref[...],
                     preferred_element_type=jnp.float32)
        h1 = jnp.maximum(h1 + b1_ref[...], 0.0)                 # (hw*n, c_mid)
        h2 = jnp.dot(h1, w2_ref[...],
                     preferred_element_type=jnp.float32)
        h2 = jnp.maximum(h2 + b2_ref[...], 0.0)                 # (hw*n, c_out)
        # Scatter pixel blocks into the flattened regressor-input layout:
        #   xf[n, p*c_out + c] == h2[p*n_batch + n, c]
        # (the regressor weight rows were permuted to this order at init).
        for p in range(hw):
            xf_ref[:, p * c_out:(p + 1) * c_out] = (
                h2[p * n_batch:(p + 1) * n_batch, :].astype(xf_ref.dtype))

    # Regressor column tile: (N, K) bf16 @ (K, block_n) bf16, f32 accumulate.
    logits = jnp.dot(xf_ref[...], wr_ref[...],
                     preferred_element_type=jnp.float32) + br_ref[...]
    e = jnp.exp(-logits)                                  # EUP
    sig = pl.reciprocal(1.0 + e, approx=True)             # EUP
    o_ref[...] = jnp.minimum(sig, 1.0).astype(o_ref.dtype)


# ----------------------------------------------------------------------------
# Forward (single pallas_call)
# ----------------------------------------------------------------------------
@functools.partial(jax.jit, static_argnames=("num_output",))
def mynet_forward(kparams, x, *, num_output):
    n, c_in, h, w = x.shape
    hw = h * w
    c_mid = kparams["w1"].shape[1]
    c_out = kparams["w2"].shape[1]
    k_dim, n_pad = kparams["wr"].shape
    assert k_dim == hw * c_out
    block_n = _pick_block_n(n_pad)

    # Pixel-major rows (row index = p*N + n).  Tiny one-off transpose in XLA.
    x_pix = jnp.transpose(x, (2, 3, 0, 1)).reshape(hw * n, c_in)

    kern = functools.partial(_fused_mynet_kernel,
                             n_batch=n, hw=hw, c_out=c_out)
    out = pl.pallas_call(
        kern,
        out_shape=jax.ShapeDtypeStruct((n, n_pad), jnp.float32),
        grid=(n_pad // block_n,),
        in_specs=[
            pl.BlockSpec((hw * n, c_in), lambda j: (0, 0)),        # x (resident)
            pl.BlockSpec((c_in, c_mid), lambda j: (0, 0)),         # w1 (resident)
            pl.BlockSpec((1, c_mid), lambda j: (0, 0)),            # b1
            pl.BlockSpec((c_mid, c_out), lambda j: (0, 0)),        # w2 (resident)
            pl.BlockSpec((1, c_out), lambda j: (0, 0)),            # b2
            pl.BlockSpec((hw * c_out, block_n), lambda j: (0, j)),  # wr tile
            pl.BlockSpec((1, block_n), lambda j: (0, j)),          # br tile
        ],
        out_specs=pl.BlockSpec((n, block_n), lambda j: (0, j)),
        scratch_shapes=[pltpu.VMEM((n, hw * c_out), kparams["wr"].dtype)],
        compiler_params=pltpu.CompilerParams(
            dimension_semantics=("arbitrary",)),
    )(x_pix, kparams["w1"], kparams["b1"], kparams["w2"], kparams["b2"],
      kparams["wr"], kparams["br"])
    return out[:, :num_output]


# ----------------------------------------------------------------------------
# Parameters: torch-layout init + one-time conversion to kernel layout
# ----------------------------------------------------------------------------
def init_torch_params(key, c_in=4, c_mid=64, c_out=512, hw=5, num_output=2500):
    """Parameters in PyTorch layout (what MyNet's state_dict would hold)."""
    k1, k2, k3, k4, k5, k6 = jax.random.split(key, 6)
    u = lambda k, shp, fan_in: (jax.random.uniform(k, shp, jnp.float32, -1.0, 1.0)
                                / jnp.sqrt(jnp.float32(fan_in)))
    return {
        "w1": u(k1, (c_mid, c_in), c_in),                 # 1x1 conv (out_c, in_c)
        "b1": u(k2, (c_mid,), c_in),
        "w2": u(k3, (c_out, c_mid), c_mid),
        "b2": u(k4, (c_out,), c_mid),
        "wr": u(k5, (num_output, c_out * hw), c_out * hw),  # nn.Linear (out, in)
        "br": u(k6, (num_output,), c_out * hw),
    }


def prepare_kernel_params(tparams, h, w, weight_dtype=jnp.bfloat16):
    """One-time conversion: transpose, permute flatten order (chw -> hwc),
    pad num_output to a multiple of 128, cast the regressor weight to bf16."""
    hw = h * w
    c_mid, c_in = tparams["w1"].shape
    c_out = tparams["w2"].shape[0]
    num_output, k_dim = tparams["wr"].shape
    assert k_dim == c_out * hw
    n_pad = ((num_output + 127) // 128) * 128

    # torch.flatten of (C, H, W) is channel-major: k = c*hw + p.  The kernel
    # flattens pixel-major: k' = p*c_out + c.  Permute rows accordingly.
    wr_t = jnp.transpose(tparams["wr"])                          # (K, num_output)
    wr_hwc = (wr_t.reshape(c_out, hw, num_output)
              .transpose(1, 0, 2).reshape(hw * c_out, num_output))
    wr_pad = jnp.pad(wr_hwc, ((0, 0), (0, n_pad - num_output))).astype(weight_dtype)
    br_pad = jnp.pad(tparams["br"], (0, n_pad - num_output)).reshape(1, n_pad)

    return {
        "w1": jnp.transpose(tparams["w1"]),                      # (c_in, c_mid) f32
        "b1": tparams["b1"].reshape(1, c_mid),
        "w2": jnp.transpose(tparams["w2"]),                      # (c_mid, c_out) f32
        "b2": tparams["b2"].reshape(1, c_out),
        "wr": wr_pad,                                            # (hw*c_out, n_pad) bf16
        "br": br_pad.astype(jnp.float32),                        # (1, n_pad) f32
    }


# ----------------------------------------------------------------------------
# Pure-JAX reference (matches the PyTorch forward semantics)
# ----------------------------------------------------------------------------
def reference_forward(tparams, x):
    n, c_in, h, w = x.shape
    hp = jax.lax.Precision.HIGHEST
    xm = jnp.transpose(x, (0, 2, 3, 1)).reshape(n * h * w, c_in)
    h1 = jnp.maximum(jnp.dot(xm, tparams["w1"].T, precision=hp) + tparams["b1"], 0.0)
    h2 = jnp.maximum(jnp.dot(h1, tparams["w2"].T, precision=hp) + tparams["b2"], 0.0)
    feat = jnp.transpose(h2.reshape(n, h, w, -1), (0, 3, 1, 2)).reshape(n, -1)
    logits = jnp.dot(feat, tparams["wr"].T, precision=hp) + tparams["br"]
    return jax.nn.sigmoid(logits)


if __name__ == "__main__":
    key = jax.random.PRNGKey(0)
    kp, kx = jax.random.split(key)

    N, C_IN, H, W = 2, 4, 5, 1        # H*W = 5*1 matches the 512*5*1 flatten
    NUM_OUTPUT = 250                  # small stand-in for the default 2500
                                      # (not a multiple of 128 -> exercises padding)

    tparams = init_torch_params(kp, c_in=C_IN, hw=H * W, num_output=NUM_OUTPUT)
    kparams = prepare_kernel_params(tparams, H, W)
    x = jax.random.normal(kx, (N, C_IN, H, W), jnp.float32)

    out = mynet_forward(kparams, x, num_output=NUM_OUTPUT)
    jax.block_until_ready(out)

    assert out.shape == (N, NUM_OUTPUT)
    assert bool(jnp.all((out >= 0.0) & (out <= 1.0)))            # sigmoid range

    ref = reference_forward(tparams, x)
    max_err = float(jnp.max(jnp.abs(out - ref)))
    assert max_err < 3e-2, f"mismatch vs reference: {max_err}"

    print("KERNEL_OK")
</pallas_src>

<mosaic_0001>
module attributes {stable_mosaic.version = 11 : i64} {
  func.func @_fused_mynet_kernel(%arg0: i32, %arg1: memref<10x4xf32, #tpu.memory_space<vmem>>, %arg2: memref<4x64xf32, #tpu.memory_space<vmem>>, %arg3: memref<1x64xf32, #tpu.memory_space<vmem>>, %arg4: memref<64x512xf32, #tpu.memory_space<vmem>>, %arg5: memref<1x512xf32, #tpu.memory_space<vmem>>, %arg6: memref<2560x256xbf16, #tpu.memory_space<vmem>>, %arg7: memref<1x256xf32, #tpu.memory_space<vmem>>, %arg8: memref<2x256xf32, #tpu.memory_space<vmem>>, %arg9: memref<2x2560xbf16, #tpu.memory_space<vmem>>) attributes {dimension_semantics = [#tpu.dimension_semantics<arbitrary>], iteration_bounds = array<i64: 1>, scalar_prefetch = 0 : i64, scratch_operands = 1 : i64, tpu.core_type = #tpu.core_type<tc>, window_params = [{pipeline_mode = #tpu.pipeline_mode<synchronous>, transform_indices = @transform_0, window_bounds = array<i64: 10, 4>}, {pipeline_mode = #tpu.pipeline_mode<synchronous>, transform_indices = @transform_1, window_bounds = array<i64: 4, 64>}, {pipeline_mode = #tpu.pipeline_mode<synchronous>, transform_indices = @transform_2, window_bounds = array<i64: 1, 64>}, {pipeline_mode = #tpu.pipeline_mode<synchronous>, transform_indices = @transform_3, window_bounds = array<i64: 64, 512>}, {pipeline_mode = #tpu.pipeline_mode<synchronous>, transform_indices = @transform_4, window_bounds = array<i64: 1, 512>}, {transform_indices = @transform_5, window_bounds = array<i64: 2560, 256>}, {transform_indices = @transform_6, window_bounds = array<i64: 1, 256>}, {transform_indices = @transform_7, window_bounds = array<i64: 2, 256>}]} {
    %c0_i32 = arith.constant 0 : i32
    %0 = arith.cmpi eq, %arg0, %c0_i32 : i32
    %1 = arith.extui %0 : i1 to i32
    %c0_i32_0 = arith.constant 0 : i32
    %2 = arith.cmpi ne, %1, %c0_i32_0 : i32
    scf.if %2 {
      %c0_11 = arith.constant 0 : index
      %c0_12 = arith.constant 0 : index
      %18 = vector.load %arg1[%c0_11, %c0_12] : memref<10x4xf32, #tpu.memory_space<vmem>>, vector<10x4xf32>
      %c0_13 = arith.constant 0 : index
      %c0_14 = arith.constant 0 : index
      %19 = vector.load %arg2[%c0_13, %c0_14] : memref<4x64xf32, #tpu.memory_space<vmem>>, vector<4x64xf32>
      %cst_15 = arith.constant dense<0.000000e+00> : vector<10x64xf32>
      %20 = tpu.matmul %18, %19, %cst_15 {dimension_numbers = #tpu.dot_dimension_numbers<[1], [0], [0], [1], [0, 0, 1, 1], [], []>} : vector<10x4xf32>, vector<4x64xf32>, vector<10x64xf32> -> vector<10x64xf32>
      %c0_16 = arith.constant 0 : index
      %c0_17 = arith.constant 0 : index
      %21 = vector.load %arg3[%c0_16, %c0_17] : memref<1x64xf32, #tpu.memory_space<vmem>>, vector<1x64xf32>
      %22 = vector.broadcast %21 : vector<1x64xf32> to vector<10x64xf32>
      %23 = arith.addf %20, %22 : vector<10x64xf32>
      %cst_18 = arith.constant 0.000000e+00 : f32
      %24 = vector.broadcast %cst_18 : f32 to vector<10x64xf32>
      %25 = arith.maximumf %23, %24 : vector<10x64xf32>
      %c0_19 = arith.constant 0 : index
      %c0_20 = arith.constant 0 : index
      %26 = vector.load %arg4[%c0_19, %c0_20] : memref<64x512xf32, #tpu.memory_space<vmem>>, vector<64x512xf32>
      %cst_21 = arith.constant dense<0.000000e+00> : vector<10x512xf32>
      %27 = tpu.matmul %25, %26, %cst_21 {dimension_numbers = #tpu.dot_dimension_numbers<[1], [0], [0], [1], [0, 0, 1, 1], [], []>} : vector<10x64xf32>, vector<64x512xf32>, vector<10x512xf32> -> vector<10x512xf32>
      %c0_22 = arith.constant 0 : index
      %c0_23 = arith.constant 0 : index
      %28 = vector.load %arg5[%c0_22, %c0_23] : memref<1x512xf32, #tpu.memory_space<vmem>>, vector<1x512xf32>
      %29 = vector.broadcast %28 : vector<1x512xf32> to vector<10x512xf32>
      %30 = arith.addf %27, %29 : vector<10x512xf32>
      %cst_24 = arith.constant 0.000000e+00 : f32
      %31 = vector.broadcast %cst_24 : f32 to vector<10x512xf32>
      %32 = arith.maximumf %30, %31 : vector<10x512xf32>
      %33 = vector.extract_strided_slice %32 {offsets = [0, 0], sizes = [2, 512], strides = [1, 1]} : vector<10x512xf32> to vector<2x512xf32>
      %34 = arith.truncf %33 : vector<2x512xf32> to vector<2x512xbf16>
      %c0_25 = arith.constant 0 : index
      %c0_26 = arith.constant 0 : index
      %35 = vector.load %arg9[%c0_25, %c0_26] : memref<2x2560xbf16, #tpu.memory_space<vmem>>, vector<2x512xbf16>
      tpu.vector_store %arg9[%c0_25, %c0_26], %34 {strides = array<i32>} : memref<2x2560xbf16, #tpu.memory_space<vmem>>, vector<2x512xbf16>,
      %36 = vector.extract_strided_slice %32 {offsets = [2, 0], sizes = [2, 512], strides = [1, 1]} : vector<10x512xf32> to vector<2x512xf32>
      %37 = arith.truncf %36 : vector<2x512xf32> to vector<2x512xbf16>
      %c0_27 = arith.constant 0 : index
      %c512 = arith.constant 512 : index
      %38 = vector.load %arg9[%c0_27, %c512] : memref<2x2560xbf16, #tpu.memory_space<vmem>>, vector<2x512xbf16>
      tpu.vector_store %arg9[%c0_27, %c512], %37 {strides = array<i32>} : memref<2x2560xbf16, #tpu.memory_space<vmem>>, vector<2x512xbf16>,
      %39 = vector.extract_strided_slice %32 {offsets = [4, 0], sizes = [2, 512], strides = [1, 1]} : vector<10x512xf32> to vector<2x512xf32>
      %40 = arith.truncf %39 : vector<2x512xf32> to vector<2x512xbf16>
      %c0_28 = arith.constant 0 : index
      %c1024 = arith.constant 1024 : index
      %41 = vector.load %arg9[%c0_28, %c1024] : memref<2x2560xbf16, #tpu.memory_space<vmem>>, vector<2x512xbf16>
      tpu.vector_store %arg9[%c0_28, %c1024], %40 {strides = array<i32>} : memref<2x2560xbf16, #tpu.memory_space<vmem>>, vector<2x512xbf16>,
      %42 = vector.extract_strided_slice %32 {offsets = [6, 0], sizes = [2, 512], strides = [1, 1]} : vector<10x512xf32> to vector<2x512xf32>
      %43 = arith.truncf %42 : vector<2x512xf32> to vector<2x512xbf16>
      %c0_29 = arith.constant 0 : index
      %c1536 = arith.constant 1536 : index
      %44 = vector.load %arg9[%c0_29, %c1536] : memref<2x2560xbf16, #tpu.memory_space<vmem>>, vector<2x512xbf16>
      tpu.vector_store %arg9[%c0_29, %c1536], %43 {strides = array<i32>} : memref<2x2560xbf16, #tpu.memory_space<vmem>>, vector<2x512xbf16>,
      %45 = vector.extract_strided_slice %32 {offsets = [8, 0], sizes = [2, 512], strides = [1, 1]} : vector<10x512xf32> to vector<2x512xf32>
      %46 = arith.truncf %45 : vector<2x512xf32> to vector<2x512xbf16>
      %c0_30 = arith.constant 0 : index
      %c2048 = arith.constant 2048 : index
      %47 = vector.load %arg9[%c0_30, %c2048] : memref<2x2560xbf16, #tpu.memory_space<vmem>>, vector<2x512xbf16>
      tpu.vector_store %arg9[%c0_30, %c2048], %46 {strides = array<i32>} : memref<2x2560xbf16, #tpu.memory_space<vmem>>, vector<2x512xbf16>,
    } else {
    }
    %c0 = arith.constant 0 : index
    %c0_1 = arith.constant 0 : index
    %3 = vector.load %arg9[%c0, %c0_1] : memref<2x2560xbf16, #tpu.memory_space<vmem>>, vector<2x2560xbf16>
    %c0_2 = arith.constant 0 : index
    %c0_3 = arith.constant 0 : index
    %4 = vector.load %arg6[%c0_2, %c0_3] : memref<2560x256xbf16, #tpu.memory_space<vmem>>, vector<2560x256xbf16>
    %cst = arith.constant dense<0.000000e+00> : vector<2x256xf32>
    %5 = tpu.matmul %3, %4, %cst {dimension_numbers = #tpu.dot_dimension_numbers<[1], [0], [0], [1], [0, 0, 1, 1], [], []>} : vector<2x2560xbf16>, vector<2560x256xbf16>, vector<2x256xf32> -> vector<2x256xf32>
    %c0_4 = arith.constant 0 : index
    %c0_5 = arith.constant 0 : index
    %6 = vector.load %arg7[%c0_4, %c0_5] : memref<1x256xf32, #tpu.memory_space<vmem>>, vector<1x256xf32>
    %7 = vector.broadcast %6 : vector<1x256xf32> to vector<2x256xf32>
    %8 = arith.addf %5, %7 : vector<2x256xf32>
    %cst_6 = arith.constant 0.000000e+00 : f32
    %9 = vector.broadcast %cst_6 : f32 to vector<2x256xf32>
    %10 = arith.subf %9, %8 : vector<2x256xf32>
    %11 = math.exp %10 : vector<2x256xf32>
    %cst_7 = arith.constant 1.000000e+00 : f32
    %12 = vector.broadcast %cst_7 : f32 to vector<2x256xf32>
    %13 = arith.addf %12, %11 : vector<2x256xf32>
    %14 = tpu.reciprocal %13 {approx = true} : vector<2x256xf32> -> vector<2x256xf32>
    %cst_8 = arith.constant 1.000000e+00 : f32
    %15 = vector.broadcast %cst_8 : f32 to vector<2x256xf32>
    %16 = arith.minimumf %14, %15 : vector<2x256xf32>
    %c0_9 = arith.constant 0 : index
    %c0_10 = arith.constant 0 : index
    %17 = vector.load %arg8[%c0_9, %c0_10] : memref<2x256xf32, #tpu.memory_space<vmem>>, vector<2x256xf32>
    tpu.vector_store %arg8[%c0_9, %c0_10], %16 {strides = array<i32>} : memref<2x256xf32, #tpu.memory_space<vmem>>, vector<2x256xf32>,
    return
  }
  func.func @transform_0(%arg0: i32) -> (i32, i32) {
    %c0_i32 = arith.constant 0 : i32
    %c0_i32_0 = arith.constant 0 : i32
    %c0_i32_1 = arith.constant 0 : i32
    return %c0_i32, %c0_i32_0 : i32, i32
  }
  func.func @transform_1(%arg0: i32) -> (i32, i32) {
    %c0_i32 = arith.constant 0 : i32
    %c0_i32_0 = arith.constant 0 : i32
    %c0_i32_1 = arith.constant 0 : i32
    return %c0_i32, %c0_i32_0 : i32, i32
  }
  func.func @transform_2(%arg0: i32) -> (i32, i32) {
    %c0_i32 = arith.constant 0 : i32
    %c0_i32_0 = arith.constant 0 : i32
    %c0_i32_1 = arith.constant 0 : i32
    return %c0_i32, %c0_i32_0 : i32, i32
  }
  func.func @transform_3(%arg0: i32) -> (i32, i32) {
    %c0_i32 = arith.constant 0 : i32
    %c0_i32_0 = arith.constant 0 : i32
    %c0_i32_1 = arith.constant 0 : i32
    return %c0_i32, %c0_i32_0 : i32, i32
  }
  func.func @transform_4(%arg0: i32) -> (i32, i32) {
    %c0_i32 = arith.constant 0 : i32
    %c0_i32_0 = arith.constant 0 : i32
    %c0_i32_1 = arith.constant 0 : i32
    return %c0_i32, %c0_i32_0 : i32, i32
  }
  func.func @transform_5(%arg0: i32) -> (i32, i32) {
    %c0_i32 = arith.constant 0 : i32
    %c0_i32_0 = arith.constant 0 : i32
    return %c0_i32, %arg0 : i32, i32
  }
  func.func @transform_6(%arg0: i32) -> (i32, i32) {
    %c0_i32 = arith.constant 0 : i32
    %c0_i32_0 = arith.constant 0 : i32
    return %c0_i32, %arg0 : i32, i32
  }
  func.func @transform_7(%arg0: i32) -> (i32, i32) {
    %c0_i32 = arith.constant 0 : i32
    %c0_i32_0 = arith.constant 0 : i32
    return %c0_i32, %arg0 : i32, i32
  }
}

</mosaic_0001>

<llo_original>
// kernel: mynet_forward.1
$region0: #{mynet_forward.1}
  #allocation0 [shape = 'u32[]', space=smem, size = 0x4, offset = 0x4, fixed_abs, tag = 'smem constant byte address 0x4 - core index']
  #allocation1 [shape = 'u32[144,128]{1,0:T(1,128)}', space=vmem, size = 0x12000, scoped, tag = 'internal scratch']
  #allocation2 [shape = 'bf16[2,2560]{1,0:T(2,128)(2,1)}', space=vmem, size = 0x2800, scoped, tag = 'scratch operand']
  %s0 = inlined_call_operand.vmem [shape: f32[10,4], index: 0, kind: input, shape index: {}]
  %s1 = inlined_call_operand.hbm [shape: f32[4,64], index: 1, kind: input, shape index: {}]
  %s2 = inlined_call_operand.hbm [shape: f32[1,64], index: 2, kind: input, shape index: {}]
  %s3 = inlined_call_operand.hbm [shape: f32[64,512], index: 3, kind: input, shape index: {}]
  %s4 = inlined_call_operand.hbm [shape: f32[1,512], index: 4, kind: input, shape index: {}]
  %s5 = inlined_call_operand.hbm [shape: bf16[2560,256], index: 5, kind: input, shape index: {}]
  %s6 = inlined_call_operand.hbm [shape: f32[1,256], index: 6, kind: input, shape index: {}]
  %s7 = inlined_call_operand.hbm [shape: f32[2,256], index: 7, kind: output, shape index: {}]
  %s8 = sld [smem:[#allocation0]]
  $region66: #{mynet_forward.1} parent=0
    _
  %s10 = ssub.s32 1, %s8
  %s11 = scalar_select 0, %s10, %s8
  $region1: #{mynet_forward.1} parent=0
    #allocation3 [shape = 'u8[2048]{0}', space=vmem, size = 0x800, scoped, tag = 'input window, operand 1, single buffered']
    #allocation4 [shape = 's32[1]{0}', space=sflag, size = 0x4, scoped, tag = 'scoped memory for mynet_forward.1']
    #allocation5 [shape = 's32[1]{0}', space=sflag, size = 0x4, scoped, tag = 'scoped memory for mynet_forward.1']
    #allocation6 [shape = 'u8[512]{0}', space=vmem, size = 0x400, scoped, tag = 'input window, operand 2, single buffered']
    #allocation7 [shape = 's32[1]{0}', space=sflag, size = 0x4, scoped, tag = 'scoped memory for mynet_forward.1']
    #allocation8 [shape = 'u8[131072]{0}', space=vmem, size = 0x20000, scoped, tag = 'input window, operand 3, single buffered']
    #allocation9 [shape = 'u8[2048]{0}', space=vmem, size = 0x800, scoped, tag = 'input window, operand 4, single buffered']
    #allocation10 [shape = 's32[1]{0}', space=sflag, size = 0x4, scoped, tag = 'scoped memory for mynet_forward.1']
    #allocation11 [shape = 'u8[1310720]{0}', space=vmem, size = 0x140000, scoped, tag = 'input window, operand 5, single buffered']
    #allocation12 [shape = 'u8[1024]{0}', space=vmem, size = 0x400, scoped, tag = 'input window, operand 6, single buffered']
    #allocation13 [shape = 's32[1]{0}', space=sflag, size = 0x4, scoped, tag = 'scoped memory for mynet_forward.1']
    #allocation14 [shape = 'u8[2048]{0}', space=vmem, size = 0x800, scoped, tag = 'output window, operand 0, single buffered']
    %12 = vsyncpa [#allocation4], 0
    %13 = vsyncpa [#allocation7], 0
    %14 = vsyncpa [#allocation10], 0
    %15 = vsyncpa [#allocation13], 0
    %16 = vsyncpa [#allocation5], 0
    // Predicated region
    $region2: #{mynet_forward.1} parent=1 // pred_check
      _
    $region3: #{mynet_forward.1} parent=1 // pred_check_branch
      %18 = sbr.rel (0) target = $region5
    $region4: #{mynet_forward.1} parent=1 // pred_region
      _
    $region5: #{mynet_forward.1} parent=1 // pred_fallthru
      _
    // Predicated region
    $region6: #{mynet_forward.1} parent=1 // pred_check
      _
    $region7: #{mynet_forward.1} parent=1 // pred_check_branch
      %20 = sbr.rel (0) target = $region9
    $region8: #{mynet_forward.1} parent=1 // pred_region
      %s22 = ssub.s32 64, 64
      %23 = vsyncadd [#allocation4], %s22
      %s25 = sshll.u32 [#allocation3], 4
      %s26 = int_to_ptr.vmem [resolvable:$true] %s25
      %28 = dma.hbm_to_vmem [thread:$0]  %s1, 64, %s26, [#allocation4]
    $region9: #{mynet_forward.1} parent=1 // pred_fallthru
      _
    // Predicated region
    $region10: #{mynet_forward.1} parent=1 // pred_check
      _
    $region11: #{mynet_forward.1} parent=1 // pred_check_branch
      %30 = sbr.rel (0) target = $region13
    $region12: #{mynet_forward.1} parent=1 // pred_region
      %s32 = ssub.s32 16, 16
      %33 = vsyncadd [#allocation7], %s32
      %s35 = sshll.u32 [#allocation6], 4
      %s36 = int_to_ptr.vmem [resolvable:$true] %s35
      %38 = dma.hbm_to_vmem [thread:$0]  %s2, 16, %s36, [#allocation7]
    $region13: #{mynet_forward.1} parent=1 // pred_fallthru
      _
    // Predicated region
    $region14: #{mynet_forward.1} parent=1 // pred_check
      _
    $region15: #{mynet_forward.1} parent=1 // pred_check_branch
      %40 = sbr.rel (0) target = $region17
    $region16: #{mynet_forward.1} parent=1 // pred_region
      %s42 = ssub.s32 4096, 4096
      %43 = vsyncadd [#allocation7], %s42
      %s44 = sshll.u32 [#allocation8], 4
      %s45 = int_to_ptr.vmem [resolvable:$true] %s44
      %50 = dma.hbm_to_vmem [thread:$0]  %s3, 4096, %s45, [#allocation7], 512, 512, 32
    $region17: #{mynet_forward.1} parent=1 // pred_fallthru
      _
    // Predicated region
    $region18: #{mynet_forward.1} parent=1 // pred_check
      _
    $region19: #{mynet_forward.1} parent=1 // pred_check_branch
      %52 = sbr.rel (0) target = $region21
    $region20: #{mynet_forward.1} parent=1 // pred_region
      %s54 = ssub.s32 64, 64
      %55 = vsyncadd [#allocation10], %s54
      %s57 = sshll.u32 [#allocation9], 4
      %s58 = int_to_ptr.vmem [resolvable:$true] %s57
      %60 = dma.hbm_to_vmem [thread:$0]  %s4, 64, %s58, [#allocation10]
    $region21: #{mynet_forward.1} parent=1 // pred_fallthru
      _
    // Predicated region
    $region22: #{mynet_forward.1} parent=1 // pred_check
      _
    $region23: #{mynet_forward.1} parent=1 // pred_check_branch
      %62 = sbr.rel (0) target = $region25
    $region24: #{mynet_forward.1} parent=1 // pred_region
      %s64 = ssub.s32 40960, 40960
      %65 = vsyncadd [#allocation10], %s64
      %s66 = sshll.u32 [#allocation11], 4
      %s67 = int_to_ptr.vmem [resolvable:$true] %s66
      %72 = dma.hbm_to_vmem [thread:$0]  %s5, 40960, %s67, [#allocation10], 128, 128, 8
    $region25: #{mynet_forward.1} parent=1 // pred_fallthru
      _
    // Predicated region
    $region26: #{mynet_forward.1} parent=1 // pred_check
      _
    $region27: #{mynet_forward.1} parent=1 // pred_check_branch
      %74 = sbr.rel (0) target = $region29
    $region28: #{mynet_forward.1} parent=1 // pred_region
      %s76 = ssub.s32 32, 32
      %77 = vsyncadd [#allocation13], %s76
      %s79 = sshll.u32 [#allocation12], 4
      %s80 = int_to_ptr.vmem [resolvable:$true] %s79
      %82 = dma.hbm_to_vmem [thread:$0]  %s6, 32, %s80, [#allocation13]
    $region29: #{mynet_forward.1} parent=1 // pred_fallthru
      _
    // Predicated region
    $region30: #{mynet_forward.1} parent=1 // pred_check
      _
    $region31: #{mynet_forward.1} parent=1 // pred_check_branch
      %84 = sbr.rel (0) target = $region33
    $region32: #{mynet_forward.1} parent=1 // pred_region
      %85 = dma.done [#allocation4], 64
    $region33: #{mynet_forward.1} parent=1 // pred_fallthru
      _
    // Predicated region
    $region34: #{mynet_forward.1} parent=1 // pred_check
      _
    $region35: #{mynet_forward.1} parent=1 // pred_check_branch
      %87 = sbr.rel (0) target = $region37
    $region36: #{mynet_forward.1} parent=1 // pred_region
      %88 = dma.done [#allocation7], 16
    $region37: #{mynet_forward.1} parent=1 // pred_fallthru
      _
    // Predicated region
    $region38: #{mynet_forward.1} parent=1 // pred_check
      _
    $region39: #{mynet_forward.1} parent=1 // pred_check_branch
      %90 = sbr.rel (0) target = $region41
    $region40: #{mynet_forward.1} parent=1 // pred_region
      %91 = dma.done [#allocation7], 4096
    $region41: #{mynet_forward.1} parent=1 // pred_fallthru
      _
    // Predicated region
    $region42: #{mynet_forward.1} parent=1 // pred_check
      _
    $region43: #{mynet_forward.1} parent=1 // pred_check_branch
      %93 = sbr.rel (0) target = $region45
    $region44: #{mynet_forward.1} parent=1 // pred_region
      %94 = dma.done [#allocation10], 64
    $region45: #{mynet_forward.1} parent=1 // pred_fallthru
      _
    // Predicated region
    $region46: #{mynet_forward.1} parent=1 // pred_check
      _
    $region47: #{mynet_forward.1} parent=1 // pred_check_branch
      %96 = sbr.rel (0) target = $region49
    $region48: #{mynet_forward.1} parent=1 // pred_region
      %97 = dma.done [#allocation10], 40960
    $region49: #{mynet_forward.1} parent=1 // pred_fallthru
      _
    // Predicated region
    $region50: #{mynet_forward.1} parent=1 // pred_check
      _
    $region51: #{mynet_forward.1} parent=1 // pred_check_branch
      %99 = sbr.rel (0) target = $region53
    $region52: #{mynet_forward.1} parent=1 // pred_region
      %100 = dma.done [#allocation13], 32
    $region53: #{mynet_forward.1} parent=1 // pred_fallthru
      _
    %p101 = scmp.eq.s32.totalorder 0, 0
    // Predicated region
    $region54: #{mynet_forward.1} parent=1 // pred_check
      %p102 = pneg %p101
    $region55: #{mynet_forward.1} parent=1 // pred_check_branch
      %104 = sbr.rel (%p102) target = $region57
    $region56: #{mynet_forward.1} parent=1 // pred_region
      %v105 = vld [vmem:[%s0] sm:$0xff]
      %v106 = vld [vmem:[%s0 + $0x8] sm:$0x3]
      %v107 = vld [vmem:[#allocation3] sm:$0xf]
      %v108 = vld [vmem:[#allocation6] sm:$0x1]
      %v110 = vlaneseq
      %v111 = vshrl.u32 %v110, 7
      %v112 = vsub.s32 0, %v111
      %v113 = vrot.slane %v108, %v112
      %vm115 = vcmask 31744
      %v117 = vsel %vm115, %v105, 0
      %v120 = vsel %vm115, %v106, 0
      %vm122 = vcmask 1043456
      %v124 = vsel %vm122, %v107, 0
      %126 = vmatprep.subr.mxu0 0.0
      %127 = vmatpush1.msra.mxu0 0.0
      %128 = vmatprep.subr.mxu0 0.0
      %129 = vmatpush1.msra.mxu0 0.0
      %130 = vmatprep.subr.mxu0 0.0
      %131 = vmatpush1.msra.mxu0 0.0
      %132 = vmatprep.subr.mxu0 0.0
      %133 = vmatpush1.msra.mxu0 0.0
      %134 = vmatprep.subr.mxu0 0.0
      %135 = vmatpush1.msra.mxu0 0.0
      %136 = vmatprep.subr.mxu0 0.0
      %137 = vmatpush1.msra.mxu0 0.0
      %138 = vmatprep.subr.mxu0 0.0
      %139 = vmatpush1.msra.mxu0 0.0
      %140 = vmatprep.subr.mxu0 0.0
      %141 = vmatpush1.msra.mxu0 0.0
      %142 = vmatprep.subr.mxu0 0.0
      %143 = vmatpush1.msra.mxu0 0.0
      %144 = vmatprep.subr.mxu0 0.0
      %145 = vmatpush1.msra.mxu0 0.0
      %146 = vmatprep.subr.mxu0 0.0
      %147 = vmatpush1.msra.mxu0 0.0
      %148 = vmatprep.subr.mxu0 0.0
      %149 = vmatpush1.msra.mxu0 0.0
      %150 = vmatprep.subr.mxu0 0.0
      %151 = vmatpush1.msra.mxu0 0.0
      %152 = vmatprep.subr.mxu0 0.0
      %153 = vmatpush1.msra.mxu0 0.0
      %154 = vmatprep.subr.mxu0 0.0
      %155 = vmatpush1.msra.mxu0 0.0
      %156 = vmatprep.subr.mxu0 0.0
      %157 = vmatpush1.msra.mxu0 %v124
      %158 = vmatprep.subr.mxu0 0.0
      %159 = vmatpush2.msra.mxu0 0.0
      %160 = vmatprep.subr.mxu0 0.0
      %161 = vmatpush2.msra.mxu0 0.0
      %162 = vmatprep.subr.mxu0 0.0
      %163 = vmatpush2.msra.mxu0 0.0
      %164 = vmatprep.subr.mxu0 0.0
      %165 = vmatpush2.msra.mxu0 0.0
      %166 = vmatprep.subr.mxu0 0.0
      %167 = vmatpush2.msra.mxu0 0.0
      %168 = vmatprep.subr.mxu0 0.0
      %169 = vmatpush2.msra.mxu0 0.0
      %170 = vmatprep.subr.mxu0 0.0
      %171 = vmatpush2.msra.mxu0 0.0
      %172 = vmatprep.subr.mxu0 0.0
      %173 = vmatpush2.msra.mxu0 0.0
      %174 = vmatprep.subr.mxu0 0.0
      %175 = vmatpush2.msra.mxu0 0.0
      %176 = vmatprep.subr.mxu0 0.0
      %177 = vmatpush2.msra.mxu0 0.0
      %178 = vmatprep.subr.mxu0 0.0
      %179 = vmatpush2.msra.mxu0 0.0
      %180 = vmatprep.subr.mxu0 0.0
      %181 = vmatpush2.msra.mxu0 0.0
      %182 = vmatprep.subr.mxu0 0.0
      %183 = vmatpush2.msra.mxu0 0.0
      %184 = vmatprep.subr.mxu0 0.0
      %185 = vmatpush2.msra.mxu0 0.0
      %186 = vmatprep.subr.mxu0 0.0
      %187 = vmatpush2.msra.mxu0 0.0
      %188 = vmatprep.subr.mxu0 0.0
      %189 = vmatpush2.msra.mxu0 0.0
      %190 = vmatprep.mubr.f32.mxu0 0.0
      %191 = vmatmul.mubr.f32.gmra.mxu0 %v117
      %v192 = vpop.f32.mrf.mxu0
      %v193 = vadd.f32 %v113, %v192
      %v194 = vpop.f32.mrf.mxu0
      %195 = vmatprep.mubr.f32.mxu0 0.0
      %196 = vmatmul.mubr.f32.gmra.mxu0 %v120
      %v197 = vpop.f32.mrf.mxu0
      %v198 = vadd.f32 %v113, %v197
      %v199 = vpop.f32.mrf.mxu0
      %200 = vdwg.mxu0
      %v201 = vmax.f32 %v193, 0.0
      %v202 = vmax.f32 %v198, 0.0
      %v203 = vld [vmem:[#allocation8] sm:$0xff]
      %v204 = vld [vmem:[#allocation8 + $0x8] sm:$0xff]
      %v205 = vld [vmem:[#allocation8 + $0x10] sm:$0xff]
      %v206 = vld [vmem:[#allocation8 + $0x18] sm:$0xff]
      %v207 = vld [vmem:[#allocation8 + $0x20] sm:$0xff]
      %v208 = vld [vmem:[#allocation8 + $0x28] sm:$0xff]
      %v209 = vld [vmem:[#allocation8 + $0x30] sm:$0xff]
      %v210 = vld [vmem:[#allocation8 + $0x38] sm:$0xff]
      %v211 = vld [vmem:[#allocation8 + $0x40] sm:$0xff]
      %v212 = vld [vmem:[#allocation8 + $0x48] sm:$0xff]
      %v213 = vld [vmem:[#allocation8 + $0x50] sm:$0xff]
      %v214 = vld [vmem:[#allocation8 + $0x58] sm:$0xff]
      %v215 = vld [vmem:[#allocation8 + $0x60] sm:$0xff]
      %v216 = vld [vmem:[#allocation8 + $0x68] sm:$0xff]
      %v217 = vld [vmem:[#allocation8 + $0x70] sm:$0xff]
      %v218 = vld [vmem:[#allocation8 + $0x78] sm:$0xff]
      %v219 = vld [vmem:[#allocation8 + $0x80] sm:$0xff]
      %v220 = vld [vmem:[#allocation8 + $0x88] sm:$0xff]
      %v221 = vld [vmem:[#allocation8 + $0x90] sm:$0xff]
      %v222 = vld [vmem:[#allocation8 + $0x98] sm:$0xff]
      %v223 = vld [vmem:[#allocation8 + $0xa0] sm:$0xff]
      %v224 = vld [vmem:[#allocation8 + $0xa8] sm:$0xff]
      %v225 = vld [vmem:[#allocation8 + $0xb0] sm:$0xff]
      %v226 = vld [vmem:[#allocation8 + $0xb8] sm:$0xff]
      %v227 = vld [vmem:[#allocation8 + $0xc0] sm:$0xff]
      %v228 = vld [vmem:[#allocation8 + $0xc8] sm:$0xff]
      %v229 = vld [vmem:[#allocation8 + $0xd0] sm:$0xff]
      %v230 = vld [vmem:[#allocation8 + $0xd8] sm:$0xff]
      %v231 = vld [vmem:[#allocation8 + $0xe0] sm:$0xff]
      %v232 = vld [vmem:[#allocation8 + $0xe8] sm:$0xff]
      %v233 = vld [vmem:[#allocation8 + $0xf0] sm:$0xff]
      %v234 = vld [vmem:[#allocation8 + $0xf8] sm:$0xff]
      %v235 = vld [vmem:[#allocation9] sm:$0xf]
      %v237 = vlaneseq
      %v238 = vshrl.u32 %v237, 7
      %v239 = vsub.s32 0, %v238
      %v240 = vrot.slane %v235, %v239
      %v241 = vlaneseq
      %v242 = vshrl.u32 %v241, 7
      %v243 = vsub.s32 1, %v242
      %v244 = vrot.slane %v235, %v243
      %v245 = vlaneseq
      %v246 = vshrl.u32 %v245, 7
      %v247 = vsub.s32 2, %v246
      %v248 = vrot.slane %v235, %v247
      %v249 = vlaneseq
      %v250 = vshrl.u32 %v249, 7
      %v251 = vsub.s32 3, %v250
      %v252 = vrot.slane %v235, %v251
      %vm257 = vcmask 523264
      %v259 = vsel %vm257, %v201, 0
      %v262 = vsel %vm257, %v202, 0
      %264 = vmatprep.subr.mxu0 0.0
      %265 = vmatpush1.msra.mxu0 0.0
      %266 = vmatprep.subr.mxu0 0.0
      %267 = vmatpush1.msra.mxu0 0.0
      %268 = vmatprep.subr.mxu0 0.0
      %269 = vmatpush1.msra.mxu0 0.0
      %270 = vmatprep.subr.mxu0 0.0
      %271 = vmatpush1.msra.mxu0 0.0
      %272 = vmatprep.subr.mxu0 0.0
      %273 = vmatpush1.msra.mxu0 0.0
      %274 = vmatprep.subr.mxu0 0.0
      %275 = vmatpush1.msra.mxu0 0.0
      %276 = vmatprep.subr.mxu0 0.0
      %277 = vmatpush1.msra.mxu0 0.0
      %278 = vmatprep.subr.mxu0 0.0
      %279 = vmatpush1.msra.mxu0 0.0
      %280 = vmatprep.subr.mxu0 %v232
      %281 = vmatpush1.msra.mxu0 %v231
      %282 = vmatprep.subr.mxu0 %v228
      %283 = vmatpush1.msra.mxu0 %v227
      %284 = vmatprep.subr.mxu0 %v224
      %285 = vmatpush1.msra.mxu0 %v223
      %286 = vmatprep.subr.mxu0 %v220
      %287 = vmatpush1.msra.mxu0 %v219
      %288 = vmatprep.subr.mxu0 %v216
      %289 = vmatpush1.msra.mxu0 %v215
      %290 = vmatprep.subr.mxu0 %v212
      %291 = vmatpush1.msra.mxu0 %v211
      %292 = vmatprep.subr.mxu0 %v208
      %293 = vmatpush1.msra.mxu0 %v207
      %294 = vmatprep.subr.mxu0 %v204
      %295 = vmatpush1.msra.mxu0 %v203
      %296 = vmatprep.subr.mxu0 0.0
      %297 = vmatpush2.msra.mxu0 0.0
      %298 = vmatprep.subr.mxu0 0.0
      %299 = vmatpush2.msra.mxu0 0.0
      %300 = vmatprep.subr.mxu0 0.0
      %301 = vmatpush2.msra.mxu0 0.0
      %302 = vmatprep.subr.mxu0 0.0
      %303 = vmatpush2.msra.mxu0 0.0
      %304 = vmatprep.subr.mxu0 0.0
      %305 = vmatpush2.msra.mxu0 0.0
      %306 = vmatprep.subr.mxu0 0.0
      %307 = vmatpush2.msra.mxu0 0.0
      %308 = vmatprep.subr.mxu0 0.0
      %309 = vmatpush2.msra.mxu0 0.0
      %310 = vmatprep.subr.mxu0 0.0
      %311 = vmatpush2.msra.mxu0 0.0
      %312 = vmatprep.subr.mxu0 0.0
      %313 = vmatpush2.msra.mxu0 0.0
      %314 = vmatprep.subr.mxu0 0.0
      %315 = vmatpush2.msra.mxu0 0.0
      %316 = vmatprep.subr.mxu0 0.0
      %317 = vmatpush2.msra.mxu0 0.0
      %318 = vmatprep.subr.mxu0 0.0
      %319 = vmatpush2.msra.mxu0 0.0
      %320 = vmatprep.subr.mxu0 0.0
      %321 = vmatpush2.msra.mxu0 0.0
      %322 = vmatprep.subr.mxu0 0.0
      %323 = vmatpush2.msra.mxu0 0.0
      %324 = vmatprep.subr.mxu0 0.0
      %325 = vmatpush2.msra.mxu0 0.0
      %326 = vmatprep.subr.mxu0 0.0
      %327 = vmatpush2.msra.mxu0 0.0
      %328 = vmatprep.mubr.f32.mxu0 0.0
      %329 = vmatmul.mubr.f32.gmra.mxu0 %v259
      %v330 = vpop.f32.mrf.mxu0
      %v331 = vadd.f32 %v240, %v330
      %v332 = vpop.f32.mrf.mxu0
      %v333 = vadd.f32 %v244, %v332
      %334 = vmatprep.mubr.f32.mxu0 0.0
      %335 = vmatmul.mubr.f32.gmra.mxu0 %v262
      %v336 = vpop.f32.mrf.mxu0
      %v337 = vadd.f32 %v240, %v336
      %v338 = vpop.f32.mrf.mxu0
      %v339 = vadd.f32 %v244, %v338
      %340 = vdwg.mxu0
      %341 = vmatprep.subr.mxu0 0.0
      %342 = vmatpush1.msra.mxu0 0.0
      %343 = vmatprep.subr.mxu0 0.0
      %344 = vmatpush1.msra.mxu0 0.0
      %345 = vmatprep.subr.mxu0 0.0
      %346 = vmatpush1.msra.mxu0 0.0
      %347 = vmatprep.subr.mxu0 0.0
      %348 = vmatpush1.msra.mxu0 0.0
      %349 = vmatprep.subr.mxu0 0.0
      %350 = vmatpush1.msra.mxu0 0.0
      %351 = vmatprep.subr.mxu0 0.0
      %352 = vmatpush1.msra.mxu0 0.0
      %353 = vmatprep.subr.mxu0 0.0
      %354 = vmatpush1.msra.mxu0 0.0
      %355 = vmatprep.subr.mxu0 0.0
      %356 = vmatpush1.msra.mxu0 0.0
      %357 = vmatprep.subr.mxu0 %v234
      %358 = vmatpush1.msra.mxu0 %v233
      %359 = vmatprep.subr.mxu0 %v230
      %360 = vmatpush1.msra.mxu0 %v229
      %361 = vmatprep.subr.mxu0 %v226
      %362 = vmatpush1.msra.mxu0 %v225
      %363 = vmatprep.subr.mxu0 %v222
      %364 = vmatpush1.msra.mxu0 %v221
      %365 = vmatprep.subr.mxu0 %v218
      %366 = vmatpush1.msra.mxu0 %v217
      %367 = vmatprep.subr.mxu0 %v214
      %368 = vmatpush1.msra.mxu0 %v213
      %369 = vmatprep.subr.mxu0 %v210
      %370 = vmatpush1.msra.mxu0 %v209
      %371 = vmatprep.subr.mxu0 %v206
      %372 = vmatpush1.msra.mxu0 %v205
      %373 = vmatprep.subr.mxu0 0.0
      %374 = vmatpush2.msra.mxu0 0.0
      %375 = vmatprep.subr.mxu0 0.0
      %376 = vmatpush2.msra.mxu0 0.0
      %377 = vmatprep.subr.mxu0 0.0
      %378 = vmatpush2.msra.mxu0 0.0
      %379 = vmatprep.subr.mxu0 0.0
      %380 = vmatpush2.msra.mxu0 0.0
      %381 = vmatprep.subr.mxu0 0.0
      %382 = vmatpush2.msra.mxu0 0.0
      %383 = vmatprep.subr.mxu0 0.0
      %384 = vmatpush2.msra.mxu0 0.0
      %385 = vmatprep.subr.mxu0 0.0
      %386 = vmatpush2.msra.mxu0 0.0
      %387 = vmatprep.subr.mxu0 0.0
      %388 = vmatpush2.msra.mxu0 0.0
      %389 = vmatprep.subr.mxu0 0.0
      %390 = vmatpush2.msra.mxu0 0.0
      %391 = vmatprep.subr.mxu0 0.0
      %392 = vmatpush2.msra.mxu0 0.0
      %393 = vmatprep.subr.mxu0 0.0
      %394 = vmatpush2.msra.mxu0 0.0
      %395 = vmatprep.subr.mxu0 0.0
      %396 = vmatpush2.msra.mxu0 0.0
      %397 = vmatprep.subr.mxu0 0.0
      %398 = vmatpush2.msra.mxu0 0.0
      %399 = vmatprep.subr.mxu0 0.0
      %400 = vmatpush2.msra.mxu0 0.0
      %401 = vmatprep.subr.mxu0 0.0
      %402 = vmatpush2.msra.mxu0 0.0
      %403 = vmatprep.subr.mxu0 0.0
      %404 = vmatpush2.msra.mxu0 0.0
      %405 = vmatprep.mubr.f32.mxu0 0.0
      %406 = vmatmul.mubr.f32.gmra.mxu0 %v259
      %v407 = vpop.f32.mrf.mxu0
      %v408 = vadd.f32 %v248, %v407
      %v409 = vpop.f32.mrf.mxu0
      %v410 = vadd.f32 %v252, %v409
      %411 = vmatprep.mubr.f32.mxu0 0.0
      %412 = vmatmul.mubr.f32.gmra.mxu0 %v262
      %v413 = vpop.f32.mrf.mxu0
      %v414 = vadd.f32 %v248, %v413
      %v415 = vpop.f32.mrf.mxu0
      %v416 = vadd.f32 %v252, %v415
      %417 = vdwg.mxu0
      %v418 = vmax.f32 %v331, 0.0
      %v419 = vmax.f32 %v333, 0.0
      %v420 = vmax.f32 %v408, 0.0
      %v421 = vmax.f32 %v410, 0.0
      %v422 = vmax.f32 %v337, 0.0
      %v423 = vmax.f32 %v339, 0.0
      %v424 = vmax.f32 %v414, 0.0
      %v425 = vmax.f32 %v416, 0.0
      %v426 = vpack.c.bf16 %v418, %v418
      %v427 = vpack.c.bf16 %v419, %v419
      %v428 = vpack.c.bf16 %v420, %v420
      %v429 = vpack.c.bf16 %v421, %v421
      %v434 = vcombine.low %v426, %v427
      %v435 = vcombine.low %v428, %v429
      %v437 = vunpack.c.l.s4 1966171168
      %v438 = vunpack.c.0.s8 %v437
      %v439 = vlaneseq
      %v440 = vshrl.u32 %v439, 7
      %v441 = vsub.s32 %v438, %v440
      %v442 = vrot.slane %v434, %v441
      %v444 = vunpack.c.l.s4 1966171168
      %v445 = vunpack.c.0.s8 %v444
      %v446 = vlaneseq
      %v447 = vshrl.u32 %v446, 7
      %v448 = vsub.s32 %v445, %v447
      %v449 = vrot.slane %v435, %v448
      %v450 = vcombine.low %v442, %v449
      %v452 = vunpack.c.l.s4 1966171168
      %v453 = vunpack.c.0.s8 %v452
      %v454 = vlaneseq
      %v455 = vshrl.u32 %v454, 7
      %v456 = vsub.s32 %v453, %v455
      %v457 = vrot.slane %v450, %v456
      %459 = vst [vmem:[#allocation2] sm:$0xf] %v457
      %v460 = vcombine.high %v442, %v449
      %v462 = vunpack.c.l.s4 1966171168
      %v463 = vunpack.c.0.s8 %v462
      %v464 = vlaneseq
      %v465 = vshrl.u32 %v464, 7
      %v466 = vsub.s32 %v463, %v465
      %v467 = vrot.slane %v460, %v466
      %469 = vst [vmem:[#allocation2 + $0x4] sm:$0xf] %v467
      %v470 = vcombine.high %v457, %v457
      %472 = vst [vmem:[#allocation2 + $0x8] sm:$0xf] %v470
      %v473 = vcombine.high %v467, %v467
      %475 = vst [vmem:[#allocation2 + $0xc] sm:$0xf] %v473
      %v476 = vpack.c.bf16 %v422, %v422
      %v477 = vpack.c.bf16 %v423, %v423
      %v478 = vpack.c.bf16 %v424, %v424
      %v479 = vpack.c.bf16 %v425, %v425
      %v484 = vcombine.low %v476, %v477
      %v485 = vcombine.low %v478, %v479
      %v487 = vunpack.c.l.s4 1966171168
      %v488 = vunpack.c.0.s8 %v487
      %v489 = vlaneseq
      %v490 = vshrl.u32 %v489, 7
      %v491 = vsub.s32 %v488, %v490
      %v492 = vrot.slane %v484, %v491
      %v494 = vunpack.c.l.s4 1966171168
      %v495 = vunpack.c.0.s8 %v494
      %v496 = vlaneseq
      %v497 = vshrl.u32 %v496, 7
      %v498 = vsub.s32 %v495, %v497
      %v499 = vrot.slane %v485, %v498
      %v500 = vcombine.low %v492, %v499
      %v502 = vunpack.c.l.s4 1966171168
      %v503 = vunpack.c.0.s8 %v502
      %v504 = vlaneseq
      %v505 = vshrl.u32 %v504, 7
      %v506 = vsub.s32 %v503, %v505
      %v507 = vrot.slane %v500, %v506
      %509 = vst [vmem:[#allocation2 + $0x10] sm:$0xf] %v507
    $region57: #{mynet_forward.1} parent=1 // pred_fallthru
      _
    %v510 = vld [vmem:[#allocation2] sm:$0xff]
    %v511 = vld [vmem:[#allocation2 + $0x8] sm:$0xff]
    %v512 = vld [vmem:[#allocation2 + $0x10] sm:$0xf]
    %v513 = vld [vmem:[#allocation11] sm:$0xff]
    %v514 = vld [vmem:[#allocation11 + $0x8] sm:$0xff]
    %v515 = vld [vmem:[#allocation11 + $0x10] sm:$0xff]
    %v516 = vld [vmem:[#allocation11 + $0x18] sm:$0xff]
    %v517 = vld [vmem:[#allocation11 + $0x20] sm:$0xff]
    %v518 = vld [vmem:[#allocation11 + $0x28] sm:$0xff]
    %v519 = vld [vmem:[#allocation11 + $0x30] sm:$0xff]
    %v520 = vld [vmem:[#allocation11 + $0x38] sm:$0xff]
    %v521 = vld [vmem:[#allocation11 + $0x40] sm:$0xff]
    %v522 = vld [vmem:[#allocation11 + $0x48] sm:$0xff]
    %v523 = vld [vmem:[#allocation11 + $0x50] sm:$0xff]
    %v524 = vld [vmem:[#allocation11 + $0x58] sm:$0xff]
    %v525 = vld [vmem:[#allocation11 + $0x60] sm:$0xff]
    %v526 = vld [vmem:[#allocation11 + $0x68] sm:$0xff]
    %v527 = vld [vmem:[#allocation11 + $0x70] sm:$0xff]
    %v528 = vld [vmem:[#allocation11 + $0x78] sm:$0xff]
    %v529 = vld [vmem:[#allocation11 + $0x80] sm:$0xff]
    %v530 = vld [vmem:[#allocation11 + $0x88] sm:$0xff]
    %v531 = vld [vmem:[#allocation11 + $0x90] sm:$0xff]
    %v532 = vld [vmem:[#allocation11 + $0x98] sm:$0xff]
    %v533 = vld [vmem:[#allocation11 + $0xa0] sm:$0xff]
    %v534 = vld [vmem:[#allocation11 + $0xa8] sm:$0xff]
    %v535 = vld [vmem:[#allocation11 + $0xb0] sm:$0xff]
    %v536 = vld [vmem:[#allocation11 + $0xb8] sm:$0xff]
    %v537 = vld [vmem:[#allocation11 + $0xc0] sm:$0xff]
    %v538 = vld [vmem:[#allocation11 + $0xc8] sm:$0xff]
    %v539 = vld [vmem:[#allocation11 + $0xd0] sm:$0xff]
    %v540 = vld [vmem:[#allocation11 + $0xd8] sm:$0xff]
    %v541 = vld [vmem:[#allocation11 + $0xe0] sm:$0xff]
    %v542 = vld [vmem:[#allocation11 + $0xe8] sm:$0xff]
    %v543 = vld [vmem:[#allocation11 + $0xf0] sm:$0xff]
    %v544 = vld [vmem:[#allocation11 + $0xf8] sm:$0xff]
    %v545 = vld [vmem:[#allocation11 + $0x100] sm:$0xff]
    %v546 = vld [vmem:[#allocation11 + $0x108] sm:$0xff]
    %v547 = vld [vmem:[#allocation11 + $0x110] sm:$0xff]
    %v548 = vld [vmem:[#allocation11 + $0x118] sm:$0xff]
    %v549 = vld [vmem:[#allocation11 + $0x120] sm:$0xff]
    %v550 = vld [vmem:[#allocation11 + $0x128] sm:$0xff]
    %v551 = vld [vmem:[#allocation11 + $0x130] sm:$0xff]
    %v552 = vld [vmem:[#allocation11 + $0x138] sm:$0xff]
    %v553 = vld [vmem:[#allocation11 + $0x140] sm:$0xff]
    %v554 = vld [vmem:[#allocation11 + $0x148] sm:$0xff]
    %v555 = vld [vmem:[#allocation11 + $0x150] sm:$0xff]
    %v556 = vld [vmem:[#allocation11 + $0x158] sm:$0xff]
    %v557 = vld [vmem:[#allocation11 + $0x160] sm:$0xff]
    %v558 = vld [vmem:[#allocation11 + $0x168] sm:$0xff]
    %v559 = vld [vmem:[#allocation11 + $0x170] sm:$0xff]
    %v560 = vld [vmem:[#allocation11 + $0x178] sm:$0xff]
    %v561 = vld [vmem:[#allocation11 + $0x180] sm:$0xff]
    %v562 = vld [vmem:[#allocation11 + $0x188] sm:$0xff]
    %v563 = vld [vmem:[#allocation11 + $0x190] sm:$0xff]
    %v564 = vld [vmem:[#allocation11 + $0x198] sm:$0xff]
    %v565 = vld [vmem:[#allocation11 + $0x1a0] sm:$0xff]
    %v566 = vld [vmem:[#allocation11 + $0x1a8] sm:$0xff]
    %v567 = vld [vmem:[#allocation11 + $0x1b0] sm:$0xff]
    %v568 = vld [vmem:[#allocation11 + $0x1b8] sm:$0xff]
    %v569 = vld [vmem:[#allocation11 + $0x1c0] sm:$0xff]
    %v570 = vld [vmem:[#allocation11 + $0x1c8] sm:$0xff]
    %v571 = vld [vmem:[#allocation11 + $0x1d0] sm:$0xff]
    %v572 = vld [vmem:[#allocation11 + $0x1d8] sm:$0xff]
    %v573 = vld [vmem:[#allocation11 + $0x1e0] sm:$0xff]
    %v574 = vld [vmem:[#allocation11 + $0x1e8] sm:$0xff]
    %v575 = vld [vmem:[#allocation11 + $0x1f0] sm:$0xff]
    %v576 = vld [vmem:[#allocation11 + $0x1f8] sm:$0xff]
    %v577 = vld [vmem:[#allocation11 + $0x200] sm:$0xff]
    %v578 = vld [vmem:[#allocation11 + $0x208] sm:$0xff]
    %v579 = vld [vmem:[#allocation11 + $0x210] sm:$0xff]
    %v580 = vld [vmem:[#allocation11 + $0x218] sm:$0xff]
    %v581 = vld [vmem:[#allocation11 + $0x220] sm:$0xff]
    %v582 = vld [vmem:[#allocation11 + $0x228] sm:$0xff]
    %v583 = vld [vmem:[#allocation11 + $0x230] sm:$0xff]
    %v584 = vld [vmem:[#allocation11 + $0x238] sm:$0xff]
    %v585 = vld [vmem:[#allocation11 + $0x240] sm:$0xff]
    %v586 = vld [vmem:[#allocation11 + $0x248] sm:$0xff]
    %v587 = vld [vmem:[#allocation11 + $0x250] sm:$0xff]
    %v588 = vld [vmem:[#allocation11 + $0x258] sm:$0xff]
    %v589 = vld [vmem:[#allocation11 + $0x260] sm:$0xff]
    %v590 = vld [vmem:[#allocation11 + $0x268] sm:$0xff]
    %v591 = vld [vmem:[#allocation11 + $0x270] sm:$0xff]
    %v592 = vld [vmem:[#allocation11 + $0x278] sm:$0xff]
    %v593 = vld [vmem:[#allocation11 + $0x280] sm:$0xff]
    %v594 = vld [vmem:[#allocation11 + $0x288] sm:$0xff]
    %v595 = vld [vmem:[#allocation11 + $0x290] sm:$0xff]
    %v596 = vld [vmem:[#allocation11 + $0x298] sm:$0xff]
    %v597 = vld [vmem:[#allocation11 + $0x2a0] sm:$0xff]
    %v598 = vld [vmem:[#allocation11 + $0x2a8] sm:$0xff]
    %v599 = vld [vmem:[#allocation11 + $0x2b0] sm:$0xff]
    %v600 = vld [vmem:[#allocation11 + $0x2b8] sm:$0xff]
    %v601 = vld [vmem:[#allocation11 + $0x2c0] sm:$0xff]
    %v602 = vld [vmem:[#allocation11 + $0x2c8] sm:$0xff]
    %v603 = vld [vmem:[#allocation11 + $0x2d0] sm:$0xff]
    %v604 = vld [vmem:[#allocation11 + $0x2d8] sm:$0xff]
    %v605 = vld [vmem:[#allocation11 + $0x2e0] sm:$0xff]
    %v606 = vld [vmem:[#allocation11 + $0x2e8] sm:$0xff]
    %v607 = vld [vmem:[#allocation11 + $0x2f0] sm:$0xff]
    %v608 = vld [vmem:[#allocation11 + $0x2f8] sm:$0xff]
    %v609 = vld [vmem:[#allocation11 + $0x300] sm:$0xff]
    %v610 = vld [vmem:[#allocation11 + $0x308] sm:$0xff]
    %v611 = vld [vmem:[#allocation11 + $0x310] sm:$0xff]
    %v612 = vld [vmem:[#allocation11 + $0x318] sm:$0xff]
    %v613 = vld [vmem:[#allocation11 + $0x320] sm:$0xff]
    %v614 = vld [vmem:[#allocation11 + $0x328] sm:$0xff]
    %v615 = vld [vmem:[#allocation11 + $0x330] sm:$0xff]
    %v616 = vld [vmem:[#allocation11 + $0x338] sm:$0xff]
    %v617 = vld [vmem:[#allocation11 + $0x340] sm:$0xff]
    %v618 = vld [vmem:[#allocation11 + $0x348] sm:$0xff]
    %v619 = vld [vmem:[#allocation11 + $0x350] sm:$0xff]
    %v620 = vld [vmem:[#allocation11 + $0x358] sm:$0xff]
    %v621 = vld [vmem:[#allocation11 + $0x360] sm:$0xff]
    %v622 = vld [vmem:[#allocation11 + $0x368] sm:$0xff]
    %v623 = vld [vmem:[#allocation11 + $0x370] sm:$0xff]
    %v624 = vld [vmem:[#allocation11 + $0x378] sm:$0xff]
    %v625 = vld [vmem:[#allocation11 + $0x380] sm:$0xff]
    %v626 = vld [vmem:[#allocation11 + $0x388] sm:$0xff]
    %v627 = vld [vmem:[#allocation11 + $0x390] sm:$0xff]
    %v628 = vld [vmem:[#allocation11 + $0x398] sm:$0xff]
    %v629 = vld [vmem:[#allocation11 + $0x3a0] sm:$0xff]
    %v630 = vld [vmem:[#allocation11 + $0x3a8] sm:$0xff]
    %v631 = vld [vmem:[#allocation11 + $0x3b0] sm:$0xff]
    %v632 = vld [vmem:[#allocation11 + $0x3b8] sm:$0xff]
    %v633 = vld [vmem:[#allocation11 + $0x3c0] sm:$0xff]
    %v634 = vld [vmem:[#allocation11 + $0x3c8] sm:$0xff]
    %v635 = vld [vmem:[#allocation11 + $0x3d0] sm:$0xff]
    %v636 = vld [vmem:[#allocation11 + $0x3d8] sm:$0xff]
    %v637 = vld [vmem:[#allocation11 + $0x3e0] sm:$0xff]
    %v638 = vld [vmem:[#allocation11 + $0x3e8] sm:$0xff]
    %v639 = vld [vmem:[#allocation11 + $0x3f0] sm:$0xff]
    %v640 = vld [vmem:[#allocation11 + $0x3f8] sm:$0xff]
    %v641 = vld [vmem:[#allocation11 + $0x400] sm:$0xff]
    %v642 = vld [vmem:[#allocation11 + $0x408] sm:$0xff]
    %v643 = vld [vmem:[#allocation11 + $0x410] sm:$0xff]
    %v644 = vld [vmem:[#allocation11 + $0x418] sm:$0xff]
    %v645 = vld [vmem:[#allocation11 + $0x420] sm:$0xff]
    %v646 = vld [vmem:[#allocation11 + $0x428] sm:$0xff]
    %v647 = vld [vmem:[#allocation11 + $0x430] sm:$0xff]
    %v648 = vld [vmem:[#allocation11 + $0x438] sm:$0xff]
    %v649 = vld [vmem:[#allocation11 + $0x440] sm:$0xff]
    %v650 = vld [vmem:[#allocation11 + $0x448] sm:$0xff]
    %v651 = vld [vmem:[#allocation11 + $0x450] sm:$0xff]
    %v652 = vld [vmem:[#allocation11 + $0x458] sm:$0xff]
    %v653 = vld [vmem:[#allocation11 + $0x460] sm:$0xff]
    %v654 = vld [vmem:[#allocation11 + $0x468] sm:$0xff]
    %v655 = vld [vmem:[#allocation11 + $0x470] sm:$0xff]
    %v656 = vld [vmem:[#allocation11 + $0x478] sm:$0xff]
    %v657 = vld [vmem:[#allocation11 + $0x480] sm:$0xff]
    %v658 = vld [vmem:[#allocation11 + $0x488] sm:$0xff]
    %v659 = vld [vmem:[#allocation11 + $0x490] sm:$0xff]
    %v660 = vld [vmem:[#allocation11 + $0x498] sm:$0xff]
    %v661 = vld [vmem:[#allocation11 + $0x4a0] sm:$0xff]
    %v662 = vld [vmem:[#allocation11 + $0x4a8] sm:$0xff]
    %v663 = vld [vmem:[#allocation11 + $0x4b0] sm:$0xff]
    %v664 = vld [vmem:[#allocation11 + $0x4b8] sm:$0xff]
    %v665 = vld [vmem:[#allocation11 + $0x4c0] sm:$0xff]
    %v666 = vld [vmem:[#allocation11 + $0x4c8] sm:$0xff]
    %v667 = vld [vmem:[#allocation11 + $0x4d0] sm:$0xff]
    %v668 = vld [vmem:[#allocation11 + $0x4d8] sm:$0xff]
    %v669 = vld [vmem:[#allocation11 + $0x4e0] sm:$0xff]
    %v670 = vld [vmem:[#allocation11 + $0x4e8] sm:$0xff]
    %v671 = vld [vmem:[#allocation11 + $0x4f0] sm:$0xff]
    %v672 = vld [vmem:[#allocation11 + $0x4f8] sm:$0xff]
    %v673 = vld [vmem:[#allocation11 + $0x500] sm:$0xff]
    %v674 = vld [vmem:[#allocation11 + $0x508] sm:$0xff]
    %v675 = vld [vmem:[#allocation11 + $0x510] sm:$0xff]
    %v676 = vld [vmem:[#allocation11 + $0x518] sm:$0xff]
    %v677 = vld [vmem:[#allocation11 + $0x520] sm:$0xff]
    %v678 = vld [vmem:[#allocation11 + $0x528] sm:$0xff]
    %v679 = vld [vmem:[#allocation11 + $0x530] sm:$0xff]
    %v680 = vld [vmem:[#allocation11 + $0x538] sm:$0xff]
    %v681 = vld [vmem:[#allocation11 + $0x540] sm:$0xff]
    %v682 = vld [vmem:[#allocation11 + $0x548] sm:$0xff]
    %v683 = vld [vmem:[#allocation11 + $0x550] sm:$0xff]
    %v684 = vld [vmem:[#allocation11 + $0x558] sm:$0xff]
    %v685 = vld [vmem:[#allocation11 + $0x560] sm:$0xff]
    %v686 = vld [vmem:[#allocation11 + $0x568] sm:$0xff]
    %v687 = vld [vmem:[#allocation11 + $0x570] sm:$0xff]
    %v688 = vld [vmem:[#allocation11 + $0x578] sm:$0xff]
    %v689 = vld [vmem:[#allocation11 + $0x580] sm:$0xff]
    %v690 = vld [vmem:[#allocation11 + $0x588] sm:$0xff]
    %v691 = vld [vmem:[#allocation11 + $0x590] sm:$0xff]
    %v692 = vld [vmem:[#allocation11 + $0x598] sm:$0xff]
    %v693 = vld [vmem:[#allocation11 + $0x5a0] sm:$0xff]
    %v694 = vld [vmem:[#allocation11 + $0x5a8] sm:$0xff]
    %v695 = vld [vmem:[#allocation11 + $0x5b0] sm:$0xff]
    %v696 = vld [vmem:[#allocation11 + $0x5b8] sm:$0xff]
    %v697 = vld [vmem:[#allocation11 + $0x5c0] sm:$0xff]
    %v698 = vld [vmem:[#allocation11 + $0x5c8] sm:$0xff]
    %v699 = vld [vmem:[#allocation11 + $0x5d0] sm:$0xff]
    %v700 = vld [vmem:[#allocation11 + $0x5d8] sm:$0xff]
    %v701 = vld [vmem:[#allocation11 + $0x5e0] sm:$0xff]
    %v702 = vld [vmem:[#allocation11 + $0x5e8] sm:$0xff]
    %v703 = vld [vmem:[#allocation11 + $0x5f0] sm:$0xff]
    %v704 = vld [vmem:[#allocation11 + $0x5f8] sm:$0xff]
    %v705 = vld [vmem:[#allocation11 + $0x600] sm:$0xff]
    %v706 = vld [vmem:[#allocation11 + $0x608] sm:$0xff]
    %v707 = vld [vmem:[#allocation11 + $0x610] sm:$0xff]
    %v708 = vld [vmem:[#allocation11 + $0x618] sm:$0xff]
    %v709 = vld [vmem:[#allocation11 + $0x620] sm:$0xff]
    %v710 = vld [vmem:[#allocation11 + $0x628] sm:$0xff]
    %v711 = vld [vmem:[#allocation11 + $0x630] sm:$0xff]
    %v712 = vld [vmem:[#allocation11 + $0x638] sm:$0xff]
    %v713 = vld [vmem:[#allocation11 + $0x640] sm:$0xff]
    %v714 = vld [vmem:[#allocation11 + $0x648] sm:$0xff]
    %v715 = vld [vmem:[#allocation11 + $0x650] sm:$0xff]
    %v716 = vld [vmem:[#allocation11 + $0x658] sm:$0xff]
    %v717 = vld [vmem:[#allocation11 + $0x660] sm:$0xff]
    %v718 = vld [vmem:[#allocation11 + $0x668] sm:$0xff]
    %v719 = vld [vmem:[#allocation11 + $0x670] sm:$0xff]
    %v720 = vld [vmem:[#allocation11 + $0x678] sm:$0xff]
    %v721 = vld [vmem:[#allocation11 + $0x680] sm:$0xff]
    %v722 = vld [vmem:[#allocation11 + $0x688] sm:$0xff]
    %v723 = vld [vmem:[#allocation11 + $0x690] sm:$0xff]
    %v724 = vld [vmem:[#allocation11 + $0x698] sm:$0xff]
    %v725 = vld [vmem:[#allocation11 + $0x6a0] sm:$0xff]
    %v726 = vld [vmem:[#allocation11 + $0x6a8] sm:$0xff]
    %v727 = vld [vmem:[#allocation11 + $0x6b0] sm:$0xff]
    %v728 = vld [vmem:[#allocation11 + $0x6b8] sm:$0xff]
    %v729 = vld [vmem:[#allocation11 + $0x6c0] sm:$0xff]
    %v730 = vld [vmem:[#allocation11 + $0x6c8] sm:$0xff]
    %v731 = vld [vmem:[#allocation11 + $0x6d0] sm:$0xff]
    %v732 = vld [vmem:[#allocation11 + $0x6d8] sm:$0xff]
    %v733 = vld [vmem:[#allocation11 + $0x6e0] sm:$0xff]
    %v734 = vld [vmem:[#allocation11 + $0x6e8] sm:$0xff]
    %v735 = vld [vmem:[#allocation11 + $0x6f0] sm:$0xff]
    %v736 = vld [vmem:[#allocation11 + $0x6f8] sm:$0xff]
    %v737 = vld [vmem:[#allocation11 + $0x700] sm:$0xff]
    %v738 = vld [vmem:[#allocation11 + $0x708] sm:$0xff]
    %v739 = vld [vmem:[#allocation11 + $0x710] sm:$0xff]
    %v740 = vld [vmem:[#allocation11 + $0x718] sm:$0xff]
    %v741 = vld [vmem:[#allocation11 + $0x720] sm:$0xff]
    %v742 = vld [vmem:[#allocation11 + $0x728] sm:$0xff]
    %v743 = vld [vmem:[#allocation11 + $0x730] sm:$0xff]
    %v744 = vld [vmem:[#allocation11 + $0x738] sm:$0xff]
    %v745 = vld [vmem:[#allocation11 + $0x740] sm:$0xff]
    %v746 = vld [vmem:[#allocation11 + $0x748] sm:$0xff]
    %v747 = vld [vmem:[#allocation11 + $0x750] sm:$0xff]
    %v748 = vld [vmem:[#allocation11 + $0x758] sm:$0xff]
    %v749 = vld [vmem:[#allocation11 + $0x760] sm:$0xff]
    %v750 = vld [vmem:[#allocation11 + $0x768] sm:$0xff]
    %v751 = vld [vmem:[#allocation11 + $0x770] sm:$0xff]
    %v752 = vld [vmem:[#allocation11 + $0x778] sm:$0xff]
    %v753 = vld [vmem:[#allocation11 + $0x780] sm:$0xff]
    %v754 = vld [vmem:[#allocation11 + $0x788] sm:$0xff]
    %v755 = vld [vmem:[#allocation11 + $0x790] sm:$0xff]
    %v756 = vld [vmem:[#allocation11 + $0x798] sm:$0xff]
    %v757 = vld [vmem:[#allocation11 + $0x7a0] sm:$0xff]
    %v758 = vld [vmem:[#allocation11 + $0x7a8] sm:$0xff]
    %v759 = vld [vmem:[#allocation11 + $0x7b0] sm:$0xff]
    %v760 = vld [vmem:[#allocation11 + $0x7b8] sm:$0xff]
    %v761 = vld [vmem:[#allocation11 + $0x7c0] sm:$0xff]
    %v762 = vld [vmem:[#allocation11 + $0x7c8] sm:$0xff]
    %v763 = vld [vmem:[#allocation11 + $0x7d0] sm:$0xff]
    %v764 = vld [vmem:[#allocation11 + $0x7d8] sm:$0xff]
    %v765 = vld [vmem:[#allocation11 + $0x7e0] sm:$0xff]
    %v766 = vld [vmem:[#allocation11 + $0x7e8] sm:$0xff]
    %v767 = vld [vmem:[#allocation11 + $0x7f0] sm:$0xff]
    %v768 = vld [vmem:[#allocation11 + $0x7f8] sm:$0xff]
    %v769 = vld [vmem:[#allocation11 + $0x800] sm:$0xff]
    %v770 = vld [vmem:[#allocation11 + $0x808] sm:$0xff]
    %v771 = vld [vmem:[#allocation11 + $0x810] sm:$0xff]
    %v772 = vld [vmem:[#allocation11 + $0x818] sm:$0xff]
    %v773 = vld [vmem:[#allocation11 + $0x820] sm:$0xff]
    %v774 = vld [vmem:[#allocation11 + $0x828] sm:$0xff]
    %v775 = vld [vmem:[#allocation11 + $0x830] sm:$0xff]
    %v776 = vld [vmem:[#allocation11 + $0x838] sm:$0xff]
    %v777 = vld [vmem:[#allocation11 + $0x840] sm:$0xff]
    %v778 = vld [vmem:[#allocation11 + $0x848] sm:$0xff]
    %v779 = vld [vmem:[#allocation11 + $0x850] sm:$0xff]
    %v780 = vld [vmem:[#allocation11 + $0x858] sm:$0xff]
    %v781 = vld [vmem:[#allocation11 + $0x860] sm:$0xff]
    %v782 = vld [vmem:[#allocation11 + $0x868] sm:$0xff]
    %v783 = vld [vmem:[#allocation11 + $0x870] sm:$0xff]
    %v784 = vld [vmem:[#allocation11 + $0x878] sm:$0xff]
    %v785 = vld [vmem:[#allocation11 + $0x880] sm:$0xff]
    %v786 = vld [vmem:[#allocation11 + $0x888] sm:$0xff]
    %v787 = vld [vmem:[#allocation11 + $0x890] sm:$0xff]
    %v788 = vld [vmem:[#allocation11 + $0x898] sm:$0xff]
    %v789 = vld [vmem:[#allocation11 + $0x8a0] sm:$0xff]
    %v790 = vld [vmem:[#allocation11 + $0x8a8] sm:$0xff]
    %v791 = vld [vmem:[#allocation11 + $0x8b0] sm:$0xff]
    %v792 = vld [vmem:[#allocation11 + $0x8b8] sm:$0xff]
    %v793 = vld [vmem:[#allocation11 + $0x8c0] sm:$0xff]
    %v794 = vld [vmem:[#allocation11 + $0x8c8] sm:$0xff]
    %v795 = vld [vmem:[#allocation11 + $0x8d0] sm:$0xff]
    %v796 = vld [vmem:[#allocation11 + $0x8d8] sm:$0xff]
    %v797 = vld [vmem:[#allocation11 + $0x8e0] sm:$0xff]
    %v798 = vld [vmem:[#allocation11 + $0x8e8] sm:$0xff]
    %v799 = vld [vmem:[#allocation11 + $0x8f0] sm:$0xff]
    %v800 = vld [vmem:[#allocation11 + $0x8f8] sm:$0xff]
    %v801 = vld [vmem:[#allocation11 + $0x900] sm:$0xff]
    %v802 = vld [vmem:[#allocation11 + $0x908] sm:$0xff]
    %v803 = vld [vmem:[#allocation11 + $0x910] sm:$0xff]
    %v804 = vld [vmem:[#allocation11 + $0x918] sm:$0xff]
    %v805 = vld [vmem:[#allocation11 + $0x920] sm:$0xff]
    %v806 = vld [vmem:[#allocation11 + $0x928] sm:$0xff]
    %v807 = vld [vmem:[#allocation11 + $0x930] sm:$0xff]
    %v808 = vld [vmem:[#allocation11 + $0x938] sm:$0xff]
    %v809 = vld [vmem:[#allocation11 + $0x940] sm:$0xff]
    %v810 = vld [vmem:[#allocation11 + $0x948] sm:$0xff]
    %v811 = vld [vmem:[#allocation11 + $0x950] sm:$0xff]
    %v812 = vld [vmem:[#allocation11 + $0x958] sm:$0xff]
    %v813 = vld [vmem:[#allocation11 + $0x960] sm:$0xff]
    %v814 = vld [vmem:[#allocation11 + $0x968] sm:$0xff]
    %v815 = vld [vmem:[#allocation11 + $0x970] sm:$0xff]
    %v816 = vld [vmem:[#allocation11 + $0x978] sm:$0xff]
    %v817 = vld [vmem:[#allocation11 + $0x980] sm:$0xff]
    %v818 = vld [vmem:[#allocation11 + $0x988] sm:$0xff]
    %v819 = vld [vmem:[#allocation11 + $0x990] sm:$0xff]
    %v820 = vld [vmem:[#allocation11 + $0x998] sm:$0xff]
    %v821 = vld [vmem:[#allocation11 + $0x9a0] sm:$0xff]
    %v822 = vld [vmem:[#allocation11 + $0x9a8] sm:$0xff]
    %v823 = vld [vmem:[#allocation11 + $0x9b0] sm:$0xff]
    %v824 = vld [vmem:[#allocation11 + $0x9b8] sm:$0xff]
    %v825 = vld [vmem:[#allocation11 + $0x9c0] sm:$0xff]
    %v826 = vld [vmem:[#allocation11 + $0x9c8] sm:$0xff]
    %v827 = vld [vmem:[#allocation11 + $0x9d0] sm:$0xff]
    %v828 = vld [vmem:[#allocation11 + $0x9d8] sm:$0xff]
    %v829 = vld [vmem:[#allocation11 + $0x9e0] sm:$0xff]
    %v830 = vld [vmem:[#allocation11 + $0x9e8] sm:$0xff]
    %v831 = vld [vmem:[#allocation11 + $0x9f0] sm:$0xff]
    %v832 = vld [vmem:[#allocation11 + $0x9f8] sm:$0xff]
    %v833 = vld [vmem:[#allocation12] sm:$0x3]
    %v835 = vlaneseq
    %v836 = vshrl.u32 %v835, 7
    %v837 = vsub.s32 0, %v836
    %v838 = vrot.slane %v833, %v837
    %v839 = vlaneseq
    %v840 = vshrl.u32 %v839, 7
    %v841 = vsub.s32 1, %v840
    %v842 = vrot.slane %v833, %v841
    %v848 = vcombine.high %v510, %v510
    %v850 = vunpack.c.l.s4 1966171168
    %v851 = vunpack.c.0.s8 %v850
    %v852 = vlaneseq
    %v853 = vshrl.u32 %v852, 7
    %v854 = vsub.s32 %v851, %v853
    %v855 = vrot.slane %v510, %v854
    %v857 = vunpack.c.l.s4 1966171168
    %v858 = vunpack.c.0.s8 %v857
    %v859 = vlaneseq
    %v860 = vshrl.u32 %v859, 7
    %v861 = vsub.s32 %v858, %v860
    %v862 = vrot.slane %v848, %v861
    %v863 = vcombine.high %v855, %v855
    %v864 = vcombine.high %v862, %v862
    %v866 = vunpack.c.l.s4 1966171168
    %v867 = vunpack.c.0.s8 %v866
    %v868 = vlaneseq
    %v869 = vshrl.u32 %v868, 7
    %v870 = vsub.s32 %v867, %v869
    %v871 = vrot.slane %v855, %v870
    %v873 = vunpack.c.l.s4 1966171168
    %v874 = vunpack.c.0.s8 %v873
    %v875 = vlaneseq
    %v876 = vshrl.u32 %v875, 7
    %v877 = vsub.s32 %v874, %v876
    %v878 = vrot.slane %v862, %v877
    %v880 = vunpack.c.l.s4 1966171168
    %v881 = vunpack.c.0.s8 %v880
    %v882 = vlaneseq
    %v883 = vshrl.u32 %v882, 7
    %v884 = vsub.s32 %v881, %v883
    %v885 = vrot.slane %v863, %v884
    %v887 = vunpack.c.l.s4 1966171168
    %v888 = vunpack.c.0.s8 %v887
    %v889 = vlaneseq
    %v890 = vshrl.u32 %v889, 7
    %v891 = vsub.s32 %v888, %v890
    %v892 = vrot.slane %v864, %v891
    %v893 = vcombine.high %v871, %v871
    %v894 = vcombine.high %v878, %v878
    %v895 = vcombine.high %v885, %v885
    %v896 = vcombine.high %v892, %v892
    %v897 = vcombine.high %v511, %v511
    %v899 = vunpack.c.l.s4 1966171168
    %v900 = vunpack.c.0.s8 %v899
    %v901 = vlaneseq
    %v902 = vshrl.u32 %v901, 7
    %v903 = vsub.s32 %v900, %v902
    %v904 = vrot.slane %v511, %v903
    %v906 = vunpack.c.l.s4 1966171168
    %v907 = vunpack.c.0.s8 %v906
    %v908 = vlaneseq
    %v909 = vshrl.u32 %v908, 7
    %v910 = vsub.s32 %v907, %v909
    %v911 = vrot.slane %v897, %v910
    %v912 = vcombine.high %v904, %v904
    %v913 = vcombine.high %v911, %v911
    %v915 = vunpack.c.l.s4 1966171168
    %v916 = vunpack.c.0.s8 %v915
    %v917 = vlaneseq
    %v918 = vshrl.u32 %v917, 7
    %v919 = vsub.s32 %v916, %v918
    %v920 = vrot.slane %v904, %v919
    %v922 = vunpack.c.l.s4 1966171168
    %v923 = vunpack.c.0.s8 %v922
    %v924 = vlaneseq
    %v925 = vshrl.u32 %v924, 7
    %v926 = vsub.s32 %v923, %v925
    %v927 = vrot.slane %v911, %v926
    %v929 = vunpack.c.l.s4 1966171168
    %v930 = vunpack.c.0.s8 %v929
    %v931 = vlaneseq
    %v932 = vshrl.u32 %v931, 7
    %v933 = vsub.s32 %v930, %v932
    %v934 = vrot.slane %v912, %v933
    %v936 = vunpack.c.l.s4 1966171168
    %v937 = vunpack.c.0.s8 %v936
    %v938 = vlaneseq
    %v939 = vshrl.u32 %v938, 7
    %v940 = vsub.s32 %v937, %v939
    %v941 = vrot.slane %v913, %v940
    %v942 = vcombine.high %v920, %v920
    %v943 = vcombine.high %v927, %v927
    %v944 = vcombine.high %v934, %v934
    %v945 = vcombine.high %v941, %v941
    %v947 = vunpack.c.l.s4 1966171168
    %v948 = vunpack.c.0.s8 %v947
    %v949 = vlaneseq
    %v950 = vshrl.u32 %v949, 7
    %v951 = vsub.s32 %v948, %v950
    %v952 = vrot.slane %v512, %v951
    %v953 = vcombine.high %v952, %v952
    %v955 = vunpack.c.l.s4 1966171168
    %v956 = vunpack.c.0.s8 %v955
    %v957 = vlaneseq
    %v958 = vshrl.u32 %v957, 7
    %v959 = vsub.s32 %v956, %v958
    %v960 = vrot.slane %v952, %v959
    %v962 = vunpack.c.l.s4 1966171168
    %v963 = vunpack.c.0.s8 %v962
    %v964 = vlaneseq
    %v965 = vshrl.u32 %v964, 7
    %v966 = vsub.s32 %v963, %v965
    %v967 = vrot.slane %v953, %v966
    %v968 = vcombine.high %v960, %v960
    %v969 = vcombine.high %v967, %v967
    %v1310 = vunpack.c.l.b16 %v513
    %v1311 = vunpack.c.h.b16 %v513
    %v1312 = vunpack.c.l.b16 %v514
    %v1313 = vunpack.c.h.b16 %v514
    %v1314 = vunpack.c.l.b16 %v515
    %v1315 = vunpack.c.h.b16 %v515
    %v1316 = vunpack.c.l.b16 %v516
    %v1317 = vunpack.c.h.b16 %v516
    %v1318 = vunpack.c.l.b16 %v517
    %v1319 = vunpack.c.h.b16 %v517
    %v1320 = vunpack.c.l.b16 %v518
    %v1321 = vunpack.c.h.b16 %v518
    %v1322 = vunpack.c.l.b16 %v519
    %v1323 = vunpack.c.h.b16 %v519
    %v1324 = vunpack.c.l.b16 %v520
    %v1325 = vunpack.c.h.b16 %v520
    %v1326 = vunpack.c.l.b16 %v521
    %v1327 = vunpack.c.h.b16 %v521
    %v1328 = vunpack.c.l.b16 %v522
    %v1329 = vunpack.c.h.b16 %v522
    %v1330 = vunpack.c.l.b16 %v523
    %v1331 = vunpack.c.h.b16 %v523
    %v1332 = vunpack.c.l.b16 %v524
    %v1333 = vunpack.c.h.b16 %v524
    %v1334 = vunpack.c.l.b16 %v525
    %v1335 = vunpack.c.h.b16 %v525
    %v1336 = vunpack.c.l.b16 %v526
    %v1337 = vunpack.c.h.b16 %v526
    %v1338 = vunpack.c.l.b16 %v527
    %v1339 = vunpack.c.h.b16 %v527
    %v1340 = vunpack.c.l.b16 %v528
    %v1341 = vunpack.c.h.b16 %v528
    %v1342 = vunpack.c.l.b16 %v529
    %v1343 = vunpack.c.h.b16 %v529
    %v1344 = vunpack.c.l.b16 %v530
    %v1345 = vunpack.c.h.b16 %v530
    %v1346 = vunpack.c.l.b16 %v531
    %v1347 = vunpack.c.h.b16 %v531
    %v1348 = vunpack.c.l.b16 %v532
    %v1349 = vunpack.c.h.b16 %v532
    %v1350 = vunpack.c.l.b16 %v533
    %v1351 = vunpack.c.h.b16 %v533
    %v1352 = vunpack.c.l.b16 %v534
    %v1353 = vunpack.c.h.b16 %v534
    %v1354 = vunpack.c.l.b16 %v535
    %v1355 = vunpack.c.h.b16 %v535
    %v1356 = vunpack.c.l.b16 %v536
    %v1357 = vunpack.c.h.b16 %v536
    %v1358 = vunpack.c.l.b16 %v537
    %v1359 = vunpack.c.h.b16 %v537
    %v1360 = vunpack.c.l.b16 %v538
    %v1361 = vunpack.c.h.b16 %v538
    %v1362 = vunpack.c.l.b16 %v539
    %v1363 = vunpack.c.h.b16 %v539
    %v1364 = vunpack.c.l.b16 %v540
    %v1365 = vunpack.c.h.b16 %v540
    %v1366 = vunpack.c.l.b16 %v541
    %v1367 = vunpack.c.h.b16 %v541
    %v1368 = vunpack.c.l.b16 %v542
    %v1369 = vunpack.c.h.b16 %v542
    %v1370 = vunpack.c.l.b16 %v543
    %v1371 = vunpack.c.h.b16 %v543
    %v1372 = vunpack.c.l.b16 %v544
    %v1373 = vunpack.c.h.b16 %v544
    %v1374 = vunpack.c.l.b16 %v545
    %v1375 = vunpack.c.h.b16 %v545
    %v1376 = vunpack.c.l.b16 %v546
    %v1377 = vunpack.c.h.b16 %v546
    %v1378 = vunpack.c.l.b16 %v547
    %v1379 = vunpack.c.h.b16 %v547
    %v1380 = vunpack.c.l.b16 %v548
    %v1381 = vunpack.c.h.b16 %v548
    %v1382 = vunpack.c.l.b16 %v549
    %v1383 = vunpack.c.h.b16 %v549
    %v1384 = vunpack.c.l.b16 %v550
    %v1385 = vunpack.c.h.b16 %v550
    %v1386 = vunpack.c.l.b16 %v551
    %v1387 = vunpack.c.h.b16 %v551
    %v1388 = vunpack.c.l.b16 %v552
    %v1389 = vunpack.c.h.b16 %v552
    %v1390 = vunpack.c.l.b16 %v553
    %v1391 = vunpack.c.h.b16 %v553
    %v1392 = vunpack.c.l.b16 %v554
    %v1393 = vunpack.c.h.b16 %v554
    %v1394 = vunpack.c.l.b16 %v555
    %v1395 = vunpack.c.h.b16 %v555
    %v1396 = vunpack.c.l.b16 %v556
    %v1397 = vunpack.c.h.b16 %v556
    %v1398 = vunpack.c.l.b16 %v557
    %v1399 = vunpack.c.h.b16 %v557
    %v1400 = vunpack.c.l.b16 %v558
    %v1401 = vunpack.c.h.b16 %v558
    %v1402 = vunpack.c.l.b16 %v559
    %v1403 = vunpack.c.h.b16 %v559
    %v1404 = vunpack.c.l.b16 %v560
    %v1405 = vunpack.c.h.b16 %v560
    %v1406 = vunpack.c.l.b16 %v561
    %v1407 = vunpack.c.h.b16 %v561
    %v1408 = vunpack.c.l.b16 %v562
    %v1409 = vunpack.c.h.b16 %v562
    %v1410 = vunpack.c.l.b16 %v563
    %v1411 = vunpack.c.h.b16 %v563
    %v1412 = vunpack.c.l.b16 %v564
    %v1413 = vunpack.c.h.b16 %v564
    %v1414 = vunpack.c.l.b16 %v565
    %v1415 = vunpack.c.h.b16 %v565
    %v1416 = vunpack.c.l.b16 %v566
    %v1417 = vunpack.c.h.b16 %v566
    %v1418 = vunpack.c.l.b16 %v567
    %v1419 = vunpack.c.h.b16 %v567
    %v1420 = vunpack.c.l.b16 %v568
    %v1421 = vunpack.c.h.b16 %v568
    %v1422 = vunpack.c.l.b16 %v569
    %v1423 = vunpack.c.h.b16 %v569
    %v1424 = vunpack.c.l.b16 %v570
    %v1425 = vunpack.c.h.b16 %v570
    %v1426 = vunpack.c.l.b16 %v571
    %v1427 = vunpack.c.h.b16 %v571
    %v1428 = vunpack.c.l.b16 %v572
    %v1429 = vunpack.c.h.b16 %v572
    %v1430 = vunpack.c.l.b16 %v573
    %v1431 = vunpack.c.h.b16 %v573
    %v1432 = vunpack.c.l.b16 %v574
    %v1433 = vunpack.c.h.b16 %v574
    %v1434 = vunpack.c.l.b16 %v575
    %v1435 = vunpack.c.h.b16 %v575
    %v1436 = vunpack.c.l.b16 %v576
    %v1437 = vunpack.c.h.b16 %v576
    %v1438 = vunpack.c.l.b16 %v577
    %v1439 = vunpack.c.h.b16 %v577
    %v1440 = vunpack.c.l.b16 %v578
    %v1441 = vunpack.c.h.b16 %v578
    %v1442 = vunpack.c.l.b16 %v579
    %v1443 = vunpack.c.h.b16 %v579
    %v1444 = vunpack.c.l.b16 %v580
    %v1445 = vunpack.c.h.b16 %v580
    %v1446 = vunpack.c.l.b16 %v581
    %v1447 = vunpack.c.h.b16 %v581
    %v1448 = vunpack.c.l.b16 %v582
    %v1449 = vunpack.c.h.b16 %v582
    %v1450 = vunpack.c.l.b16 %v583
    %v1451 = vunpack.c.h.b16 %v583
    %v1452 = vunpack.c.l.b16 %v584
    %v1453 = vunpack.c.h.b16 %v584
    %v1454 = vunpack.c.l.b16 %v585
    %v1455 = vunpack.c.h.b16 %v585
    %v1456 = vunpack.c.l.b16 %v586
    %v1457 = vunpack.c.h.b16 %v586
    %v1458 = vunpack.c.l.b16 %v587
    %v1459 = vunpack.c.h.b16 %v587
    %v1460 = vunpack.c.l.b16 %v588
    %v1461 = vunpack.c.h.b16 %v588
    %v1462 = vunpack.c.l.b16 %v589
    %v1463 = vunpack.c.h.b16 %v589
    %v1464 = vunpack.c.l.b16 %v590
    %v1465 = vunpack.c.h.b16 %v590
    %v1466 = vunpack.c.l.b16 %v591
    %v1467 = vunpack.c.h.b16 %v591
    %v1468 = vunpack.c.l.b16 %v592
    %v1469 = vunpack.c.h.b16 %v592
    %v1470 = vunpack.c.l.b16 %v593
    %v1471 = vunpack.c.h.b16 %v593
    %v1472 = vunpack.c.l.b16 %v594
    %v1473 = vunpack.c.h.b16 %v594
    %v1474 = vunpack.c.l.b16 %v595
    %v1475 = vunpack.c.h.b16 %v595
    %v1476 = vunpack.c.l.b16 %v596
    %v1477 = vunpack.c.h.b16 %v596
    %v1478 = vunpack.c.l.b16 %v597
    %v1479 = vunpack.c.h.b16 %v597
    %v1480 = vunpack.c.l.b16 %v598
    %v1481 = vunpack.c.h.b16 %v598
    %v1482 = vunpack.c.l.b16 %v599
    %v1483 = vunpack.c.h.b16 %v599
    %v1484 = vunpack.c.l.b16 %v600
    %v1485 = vunpack.c.h.b16 %v600
    %v1486 = vunpack.c.l.b16 %v601
    %v1487 = vunpack.c.h.b16 %v601
    %v1488 = vunpack.c.l.b16 %v602
    %v1489 = vunpack.c.h.b16 %v602
    %v1490 = vunpack.c.l.b16 %v603
    %v1491 = vunpack.c.h.b16 %v603
    %v1492 = vunpack.c.l.b16 %v604
    %v1493 = vunpack.c.h.b16 %v604
    %v1494 = vunpack.c.l.b16 %v605
    %v1495 = vunpack.c.h.b16 %v605
    %v1496 = vunpack.c.l.b16 %v606
    %v1497 = vunpack.c.h.b16 %v606
    %v1498 = vunpack.c.l.b16 %v607
    %v1499 = vunpack.c.h.b16 %v607
    %v1500 = vunpack.c.l.b16 %v608
    %v1501 = vunpack.c.h.b16 %v608
    %v1502 = vunpack.c.l.b16 %v609
    %v1503 = vunpack.c.h.b16 %v609
    %v1504 = vunpack.c.l.b16 %v610
    %v1505 = vunpack.c.h.b16 %v610
    %v1506 = vunpack.c.l.b16 %v611
    %v1507 = vunpack.c.h.b16 %v611
    %v1508 = vunpack.c.l.b16 %v612
    %v1509 = vunpack.c.h.b16 %v612
    %v1510 = vunpack.c.l.b16 %v613
    %v1511 = vunpack.c.h.b16 %v613
    %v1512 = vunpack.c.l.b16 %v614
    %v1513 = vunpack.c.h.b16 %v614
    %v1514 = vunpack.c.l.b16 %v615
    %v1515 = vunpack.c.h.b16 %v615
    %v1516 = vunpack.c.l.b16 %v616
    %v1517 = vunpack.c.h.b16 %v616
    %v1518 = vunpack.c.l.b16 %v617
    %v1519 = vunpack.c.h.b16 %v617
    %v1520 = vunpack.c.l.b16 %v618
    %v1521 = vunpack.c.h.b16 %v618
    %v1522 = vunpack.c.l.b16 %v619
    %v1523 = vunpack.c.h.b16 %v619
    %v1524 = vunpack.c.l.b16 %v620
    %v1525 = vunpack.c.h.b16 %v620
    %v1526 = vunpack.c.l.b16 %v621
    %v1527 = vunpack.c.h.b16 %v621
    %v1528 = vunpack.c.l.b16 %v622
    %v1529 = vunpack.c.h.b16 %v622
    %v1530 = vunpack.c.l.b16 %v623
    %v1531 = vunpack.c.h.b16 %v623
    %v1532 = vunpack.c.l.b16 %v624
    %v1533 = vunpack.c.h.b16 %v624
    %v1534 = vunpack.c.l.b16 %v625
    %v1535 = vunpack.c.h.b16 %v625
    %v1536 = vunpack.c.l.b16 %v626
    %v1537 = vunpack.c.h.b16 %v626
    %v1538 = vunpack.c.l.b16 %v627
    %v1539 = vunpack.c.h.b16 %v627
    %v1540 = vunpack.c.l.b16 %v628
    %v1541 = vunpack.c.h.b16 %v628
    %v1542 = vunpack.c.l.b16 %v629
    %v1543 = vunpack.c.h.b16 %v629
    %v1544 = vunpack.c.l.b16 %v630
    %v1545 = vunpack.c.h.b16 %v630
    %v1546 = vunpack.c.l.b16 %v631
    %v1547 = vunpack.c.h.b16 %v631
    %v1548 = vunpack.c.l.b16 %v632
    %v1549 = vunpack.c.h.b16 %v632
    %v1550 = vunpack.c.l.b16 %v633
    %v1551 = vunpack.c.h.b16 %v633
    %v1552 = vunpack.c.l.b16 %v634
    %v1553 = vunpack.c.h.b16 %v634
    %v1554 = vunpack.c.l.b16 %v635
    %v1555 = vunpack.c.h.b16 %v635
    %v1556 = vunpack.c.l.b16 %v636
    %v1557 = vunpack.c.h.b16 %v636
    %v1558 = vunpack.c.l.b16 %v637
    %v1559 = vunpack.c.h.b16 %v637
    %v1560 = vunpack.c.l.b16 %v638
    %v1561 = vunpack.c.h.b16 %v638
    %v1562 = vunpack.c.l.b16 %v639
    %v1563 = vunpack.c.h.b16 %v639
    %v1564 = vunpack.c.l.b16 %v640
    %v1565 = vunpack.c.h.b16 %v640
    %v1566 = vunpack.c.l.b16 %v641
    %v1567 = vunpack.c.h.b16 %v641
    %v1568 = vunpack.c.l.b16 %v642
    %v1569 = vunpack.c.h.b16 %v642
    %v1570 = vunpack.c.l.b16 %v643
    %v1571 = vunpack.c.h.b16 %v643
    %v1572 = vunpack.c.l.b16 %v644
    %v1573 = vunpack.c.h.b16 %v644
    %v1574 = vunpack.c.l.b16 %v645
    %v1575 = vunpack.c.h.b16 %v645
    %v1576 = vunpack.c.l.b16 %v646
    %v1577 = vunpack.c.h.b16 %v646
    %v1578 = vunpack.c.l.b16 %v647
    %v1579 = vunpack.c.h.b16 %v647
    %v1580 = vunpack.c.l.b16 %v648
    %v1581 = vunpack.c.h.b16 %v648
    %v1582 = vunpack.c.l.b16 %v649
    %v1583 = vunpack.c.h.b16 %v649
    %v1584 = vunpack.c.l.b16 %v650
    %v1585 = vunpack.c.h.b16 %v650
    %v1586 = vunpack.c.l.b16 %v651
    %v1587 = vunpack.c.h.b16 %v651
    %v1588 = vunpack.c.l.b16 %v652
    %v1589 = vunpack.c.h.b16 %v652
    %v1590 = vunpack.c.l.b16 %v653
    %v1591 = vunpack.c.h.b16 %v653
    %v1592 = vunpack.c.l.b16 %v654
    %v1593 = vunpack.c.h.b16 %v654
    %v1594 = vunpack.c.l.b16 %v655
    %v1595 = vunpack.c.h.b16 %v655
    %v1596 = vunpack.c.l.b16 %v656
    %v1597 = vunpack.c.h.b16 %v656
    %v1598 = vunpack.c.l.b16 %v657
    %v1599 = vunpack.c.h.b16 %v657
    %v1600 = vunpack.c.l.b16 %v658
    %v1601 = vunpack.c.h.b16 %v658
    %v1602 = vunpack.c.l.b16 %v659
    %v1603 = vunpack.c.h.b16 %v659
    %v1604 = vunpack.c.l.b16 %v660
    %v1605 = vunpack.c.h.b16 %v660
    %v1606 = vunpack.c.l.b16 %v661
    %v1607 = vunpack.c.h.b16 %v661
    %v1608 = vunpack.c.l.b16 %v662
    %v1609 = vunpack.c.h.b16 %v662
    %v1610 = vunpack.c.l.b16 %v663
    %v1611 = vunpack.c.h.b16 %v663
    %v1612 = vunpack.c.l.b16 %v664
    %v1613 = vunpack.c.h.b16 %v664
    %v1614 = vunpack.c.l.b16 %v665
    %v1615 = vunpack.c.h.b16 %v665
    %v1616 = vunpack.c.l.b16 %v666
    %v1617 = vunpack.c.h.b16 %v666
    %v1618 = vunpack.c.l.b16 %v667
    %v1619 = vunpack.c.h.b16 %v667
    %v1620 = vunpack.c.l.b16 %v668
    %v1621 = vunpack.c.h.b16 %v668
    %v1622 = vunpack.c.l.b16 %v669
    %v1623 = vunpack.c.h.b16 %v669
    %v1624 = vunpack.c.l.b16 %v670
    %v1625 = vunpack.c.h.b16 %v670
    %v1626 = vunpack.c.l.b16 %v671
    %v1627 = vunpack.c.h.b16 %v671
    %v1628 = vunpack.c.l.b16 %v672
    %v1629 = vunpack.c.h.b16 %v672
    %v1630 = vunpack.c.l.b16 %v673
    %v1631 = vunpack.c.h.b16 %v673
    %v1632 = vunpack.c.l.b16 %v674
    %v1633 = vunpack.c.h.b16 %v674
    %v1634 = vunpack.c.l.b16 %v675
    %v1635 = vunpack.c.h.b16 %v675
    %v1636 = vunpack.c.l.b16 %v676
    %v1637 = vunpack.c.h.b16 %v676
    %v1638 = vunpack.c.l.b16 %v677
    %v1639 = vunpack.c.h.b16 %v677
    %v1640 = vunpack.c.l.b16 %v678
    %v1641 = vunpack.c.h.b16 %v678
    %v1642 = vunpack.c.l.b16 %v679
    %v1643 = vunpack.c.h.b16 %v679
    %v1644 = vunpack.c.l.b16 %v680
    %v1645 = vunpack.c.h.b16 %v680
    %v1646 = vunpack.c.l.b16 %v681
    %v1647 = vunpack.c.h.b16 %v681
    %v1648 = vunpack.c.l.b16 %v682
    %v1649 = vunpack.c.h.b16 %v682
    %v1650 = vunpack.c.l.b16 %v683
    %v1651 = vunpack.c.h.b16 %v683
    %v1652 = vunpack.c.l.b16 %v684
    %v1653 = vunpack.c.h.b16 %v684
    %v1654 = vunpack.c.l.b16 %v685
    %v1655 = vunpack.c.h.b16 %v685
    %v1656 = vunpack.c.l.b16 %v686
    %v1657 = vunpack.c.h.b16 %v686
    %v1658 = vunpack.c.l.b16 %v687
    %v1659 = vunpack.c.h.b16 %v687
    %v1660 = vunpack.c.l.b16 %v688
    %v1661 = vunpack.c.h.b16 %v688
    %v1662 = vunpack.c.l.b16 %v689
    %v1663 = vunpack.c.h.b16 %v689
    %v1664 = vunpack.c.l.b16 %v690
    %v1665 = vunpack.c.h.b16 %v690
    %v1666 = vunpack.c.l.b16 %v691
    %v1667 = vunpack.c.h.b16 %v691
    %v1668 = vunpack.c.l.b16 %v692
    %v1669 = vunpack.c.h.b16 %v692
    %v1670 = vunpack.c.l.b16 %v693
    %v1671 = vunpack.c.h.b16 %v693
    %v1672 = vunpack.c.l.b16 %v694
    %v1673 = vunpack.c.h.b16 %v694
    %v1674 = vunpack.c.l.b16 %v695
    %v1675 = vunpack.c.h.b16 %v695
    %v1676 = vunpack.c.l.b16 %v696
    %v1677 = vunpack.c.h.b16 %v696
    %v1678 = vunpack.c.l.b16 %v697
    %v1679 = vunpack.c.h.b16 %v697
    %v1680 = vunpack.c.l.b16 %v698
    %v1681 = vunpack.c.h.b16 %v698
    %v1682 = vunpack.c.l.b16 %v699
    %v1683 = vunpack.c.h.b16 %v699
    %v1684 = vunpack.c.l.b16 %v700
    %v1685 = vunpack.c.h.b16 %v700
    %v1686 = vunpack.c.l.b16 %v701
    %v1687 = vunpack.c.h.b16 %v701
    %v1688 = vunpack.c.l.b16 %v702
    %v1689 = vunpack.c.h.b16 %v702
    %v1690 = vunpack.c.l.b16 %v703
    %v1691 = vunpack.c.h.b16 %v703
    %v1692 = vunpack.c.l.b16 %v704
    %v1693 = vunpack.c.h.b16 %v704
    %v1694 = vunpack.c.l.b16 %v705
    %v1695 = vunpack.c.h.b16 %v705
    %v1696 = vunpack.c.l.b16 %v706
    %v1697 = vunpack.c.h.b16 %v706
    %v1698 = vunpack.c.l.b16 %v707
    %v1699 = vunpack.c.h.b16 %v707
    %v1700 = vunpack.c.l.b16 %v708
    %v1701 = vunpack.c.h.b16 %v708
    %v1702 = vunpack.c.l.b16 %v709
    %v1703 = vunpack.c.h.b16 %v709
    %v1704 = vunpack.c.l.b16 %v710
    %v1705 = vunpack.c.h.b16 %v710
    %v1706 = vunpack.c.l.b16 %v711
    %v1707 = vunpack.c.h.b16 %v711
    %v1708 = vunpack.c.l.b16 %v712
    %v1709 = vunpack.c.h.b16 %v712
    %v1710 = vunpack.c.l.b16 %v713
    %v1711 = vunpack.c.h.b16 %v713
    %v1712 = vunpack.c.l.b16 %v714
    %v1713 = vunpack.c.h.b16 %v714
    %v1714 = vunpack.c.l.b16 %v715
    %v1715 = vunpack.c.h.b16 %v715
    %v1716 = vunpack.c.l.b16 %v716
    %v1717 = vunpack.c.h.b16 %v716
    %v1718 = vunpack.c.l.b16 %v717
    %v1719 = vunpack.c.h.b16 %v717
    %v1720 = vunpack.c.l.b16 %v718
    %v1721 = vunpack.c.h.b16 %v718
    %v1722 = vunpack.c.l.b16 %v719
    %v1723 = vunpack.c.h.b16 %v719
    %v1724 = vunpack.c.l.b16 %v720
    %v1725 = vunpack.c.h.b16 %v720
    %v1726 = vunpack.c.l.b16 %v721
    %v1727 = vunpack.c.h.b16 %v721
    %v1728 = vunpack.c.l.b16 %v722
    %v1729 = vunpack.c.h.b16 %v722
    %v1730 = vunpack.c.l.b16 %v723
    %v1731 = vunpack.c.h.b16 %v723
    %v1732 = vunpack.c.l.b16 %v724
    %v1733 = vunpack.c.h.b16 %v724
    %v1734 = vunpack.c.l.b16 %v725
    %v1735 = vunpack.c.h.b16 %v725
    %v1736 = vunpack.c.l.b16 %v726
    %v1737 = vunpack.c.h.b16 %v726
    %v1738 = vunpack.c.l.b16 %v727
    %v1739 = vunpack.c.h.b16 %v727
    %v1740 = vunpack.c.l.b16 %v728
    %v1741 = vunpack.c.h.b16 %v728
    %v1742 = vunpack.c.l.b16 %v729
    %v1743 = vunpack.c.h.b16 %v729
    %v1744 = vunpack.c.l.b16 %v730
    %v1745 = vunpack.c.h.b16 %v730
    %v1746 = vunpack.c.l.b16 %v731
    %v1747 = vunpack.c.h.b16 %v731
    %v1748 = vunpack.c.l.b16 %v732
    %v1749 = vunpack.c.h.b16 %v732
    %v1750 = vunpack.c.l.b16 %v733
    %v1751 = vunpack.c.h.b16 %v733
    %v1752 = vunpack.c.l.b16 %v734
    %v1753 = vunpack.c.h.b16 %v734
    %v1754 = vunpack.c.l.b16 %v735
    %v1755 = vunpack.c.h.b16 %v735
    %v1756 = vunpack.c.l.b16 %v736
    %v1757 = vunpack.c.h.b16 %v736
    %v1758 = vunpack.c.l.b16 %v737
    %v1759 = vunpack.c.h.b16 %v737
    %v1760 = vunpack.c.l.b16 %v738
    %v1761 = vunpack.c.h.b16 %v738
    %v1762 = vunpack.c.l.b16 %v739
    %v1763 = vunpack.c.h.b16 %v739
    %v1764 = vunpack.c.l.b16 %v740
    %v1765 = vunpack.c.h.b16 %v740
    %v1766 = vunpack.c.l.b16 %v741
    %v1767 = vunpack.c.h.b16 %v741
    %v1768 = vunpack.c.l.b16 %v742
    %v1769 = vunpack.c.h.b16 %v742
    %v1770 = vunpack.c.l.b16 %v743
    %v1771 = vunpack.c.h.b16 %v743
    %v1772 = vunpack.c.l.b16 %v744
    %v1773 = vunpack.c.h.b16 %v744
    %v1774 = vunpack.c.l.b16 %v745
    %v1775 = vunpack.c.h.b16 %v745
    %v1776 = vunpack.c.l.b16 %v746
    %v1777 = vunpack.c.h.b16 %v746
    %v1778 = vunpack.c.l.b16 %v747
    %v1779 = vunpack.c.h.b16 %v747
    %v1780 = vunpack.c.l.b16 %v748
    %v1781 = vunpack.c.h.b16 %v748
    %v1782 = vunpack.c.l.b16 %v749
    %v1783 = vunpack.c.h.b16 %v749
    %v1784 = vunpack.c.l.b16 %v750
    %v1785 = vunpack.c.h.b16 %v750
    %v1786 = vunpack.c.l.b16 %v751
    %v1787 = vunpack.c.h.b16 %v751
    %v1788 = vunpack.c.l.b16 %v752
    %v1789 = vunpack.c.h.b16 %v752
    %v1790 = vunpack.c.l.b16 %v753
    %v1791 = vunpack.c.h.b16 %v753
    %v1792 = vunpack.c.l.b16 %v754
    %v1793 = vunpack.c.h.b16 %v754
    %v1794 = vunpack.c.l.b16 %v755
    %v1795 = vunpack.c.h.b16 %v755
    %v1796 = vunpack.c.l.b16 %v756
    %v1797 = vunpack.c.h.b16 %v756
    %v1798 = vunpack.c.l.b16 %v757
    %v1799 = vunpack.c.h.b16 %v757
    %v1800 = vunpack.c.l.b16 %v758
    %v1801 = vunpack.c.h.b16 %v758
    %v1802 = vunpack.c.l.b16 %v759
    %v1803 = vunpack.c.h.b16 %v759
    %v1804 = vunpack.c.l.b16 %v760
    %v1805 = vunpack.c.h.b16 %v760
    %v1806 = vunpack.c.l.b16 %v761
    %v1807 = vunpack.c.h.b16 %v761
    %v1808 = vunpack.c.l.b16 %v762
    %v1809 = vunpack.c.h.b16 %v762
    %v1810 = vunpack.c.l.b16 %v763
    %v1811 = vunpack.c.h.b16 %v763
    %v1812 = vunpack.c.l.b16 %v764
    %v1813 = vunpack.c.h.b16 %v764
    %v1814 = vunpack.c.l.b16 %v765
    %v1815 = vunpack.c.h.b16 %v765
    %v1816 = vunpack.c.l.b16 %v766
    %v1817 = vunpack.c.h.b16 %v766
    %v1818 = vunpack.c.l.b16 %v767
    %v1819 = vunpack.c.h.b16 %v767
    %v1820 = vunpack.c.l.b16 %v768
    %v1821 = vunpack.c.h.b16 %v768
    %v1822 = vunpack.c.l.b16 %v769
    %v1823 = vunpack.c.h.b16 %v769
    %v1824 = vunpack.c.l.b16 %v770
    %v1825 = vunpack.c.h.b16 %v770
    %v1826 = vunpack.c.l.b16 %v771
    %v1827 = vunpack.c.h.b16 %v771
    %v1828 = vunpack.c.l.b16 %v772
    %v1829 = vunpack.c.h.b16 %v772
    %v1830 = vunpack.c.l.b16 %v773
    %v1831 = vunpack.c.h.b16 %v773
    %v1832 = vunpack.c.l.b16 %v774
    %v1833 = vunpack.c.h.b16 %v774
    %v1834 = vunpack.c.l.b16 %v775
    %v1835 = vunpack.c.h.b16 %v775
    %v1836 = vunpack.c.l.b16 %v776
    %v1837 = vunpack.c.h.b16 %v776
    %v1838 = vunpack.c.l.b16 %v777
    %v1839 = vunpack.c.h.b16 %v777
    %v1840 = vunpack.c.l.b16 %v778
    %v1841 = vunpack.c.h.b16 %v778
    %v1842 = vunpack.c.l.b16 %v779
    %v1843 = vunpack.c.h.b16 %v779
    %v1844 = vunpack.c.l.b16 %v780
    %v1845 = vunpack.c.h.b16 %v780
    %v1846 = vunpack.c.l.b16 %v781
    %v1847 = vunpack.c.h.b16 %v781
    %v1848 = vunpack.c.l.b16 %v782
    %v1849 = vunpack.c.h.b16 %v782
    %v1850 = vunpack.c.l.b16 %v783
    %v1851 = vunpack.c.h.b16 %v783
    %v1852 = vunpack.c.l.b16 %v784
    %v1853 = vunpack.c.h.b16 %v784
    %v1854 = vunpack.c.l.b16 %v785
    %v1855 = vunpack.c.h.b16 %v785
    %v1856 = vunpack.c.l.b16 %v786
    %v1857 = vunpack.c.h.b16 %v786
    %v1858 = vunpack.c.l.b16 %v787
    %v1859 = vunpack.c.h.b16 %v787
    %v1860 = vunpack.c.l.b16 %v788
    %v1861 = vunpack.c.h.b16 %v788
    %v1862 = vunpack.c.l.b16 %v789
    %v1863 = vunpack.c.h.b16 %v789
    %v1864 = vunpack.c.l.b16 %v790
    %v1865 = vunpack.c.h.b16 %v790
    %v1866 = vunpack.c.l.b16 %v791
    %v1867 = vunpack.c.h.b16 %v791
    %v1868 = vunpack.c.l.b16 %v792
    %v1869 = vunpack.c.h.b16 %v792
    %v1870 = vunpack.c.l.b16 %v793
    %v1871 = vunpack.c.h.b16 %v793
    %v1872 = vunpack.c.l.b16 %v794
    %v1873 = vunpack.c.h.b16 %v794
    %v1874 = vunpack.c.l.b16 %v795
    %v1875 = vunpack.c.h.b16 %v795
    %v1876 = vunpack.c.l.b16 %v796
    %v1877 = vunpack.c.h.b16 %v796
    %v1878 = vunpack.c.l.b16 %v797
    %v1879 = vunpack.c.h.b16 %v797
    %v1880 = vunpack.c.l.b16 %v798
    %v1881 = vunpack.c.h.b16 %v798
    %v1882 = vunpack.c.l.b16 %v799
    %v1883 = vunpack.c.h.b16 %v799
    %v1884 = vunpack.c.l.b16 %v800
    %v1885 = vunpack.c.h.b16 %v800
    %v1886 = vunpack.c.l.b16 %v801
    %v1887 = vunpack.c.h.b16 %v801
    %v1888 = vunpack.c.l.b16 %v802
    %v1889 = vunpack.c.h.b16 %v802
    %v1890 = vunpack.c.l.b16 %v803
    %v1891 = vunpack.c.h.b16 %v803
    %v1892 = vunpack.c.l.b16 %v804
    %v1893 = vunpack.c.h.b16 %v804
    %v1894 = vunpack.c.l.b16 %v805
    %v1895 = vunpack.c.h.b16 %v805
    %v1896 = vunpack.c.l.b16 %v806
    %v1897 = vunpack.c.h.b16 %v806
    %v1898 = vunpack.c.l.b16 %v807
    %v1899 = vunpack.c.h.b16 %v807
    %v1900 = vunpack.c.l.b16 %v808
    %v1901 = vunpack.c.h.b16 %v808
    %v1902 = vunpack.c.l.b16 %v809
    %v1903 = vunpack.c.h.b16 %v809
    %v1904 = vunpack.c.l.b16 %v810
    %v1905 = vunpack.c.h.b16 %v810
    %v1906 = vunpack.c.l.b16 %v811
    %v1907 = vunpack.c.h.b16 %v811
    %v1908 = vunpack.c.l.b16 %v812
    %v1909 = vunpack.c.h.b16 %v812
    %v1910 = vunpack.c.l.b16 %v813
    %v1911 = vunpack.c.h.b16 %v813
    %v1912 = vunpack.c.l.b16 %v814
    %v1913 = vunpack.c.h.b16 %v814
    %v1914 = vunpack.c.l.b16 %v815
    %v1915 = vunpack.c.h.b16 %v815
    %v1916 = vunpack.c.l.b16 %v816
    %v1917 = vunpack.c.h.b16 %v816
    %v1918 = vunpack.c.l.b16 %v817
    %v1919 = vunpack.c.h.b16 %v817
    %v1920 = vunpack.c.l.b16 %v818
    %v1921 = vunpack.c.h.b16 %v818
    %v1922 = vunpack.c.l.b16 %v819
    %v1923 = vunpack.c.h.b16 %v819
    %v1924 = vunpack.c.l.b16 %v820
    %v1925 = vunpack.c.h.b16 %v820
    %v1926 = vunpack.c.l.b16 %v821
    %v1927 = vunpack.c.h.b16 %v821
    %v1928 = vunpack.c.l.b16 %v822
    %v1929 = vunpack.c.h.b16 %v822
    %v1930 = vunpack.c.l.b16 %v823
    %v1931 = vunpack.c.h.b16 %v823
    %v1932 = vunpack.c.l.b16 %v824
    %v1933 = vunpack.c.h.b16 %v824
    %v1934 = vunpack.c.l.b16 %v825
    %v1935 = vunpack.c.h.b16 %v825
    %v1936 = vunpack.c.l.b16 %v826
    %v1937 = vunpack.c.h.b16 %v826
    %v1938 = vunpack.c.l.b16 %v827
    %v1939 = vunpack.c.h.b16 %v827
    %v1940 = vunpack.c.l.b16 %v828
    %v1941 = vunpack.c.h.b16 %v828
    %v1942 = vunpack.c.l.b16 %v829
    %v1943 = vunpack.c.h.b16 %v829
    %v1944 = vunpack.c.l.b16 %v830
    %v1945 = vunpack.c.h.b16 %v830
    %v1946 = vunpack.c.l.b16 %v831
    %v1947 = vunpack.c.h.b16 %v831
    %v1948 = vunpack.c.l.b16 %v832
    %v1949 = vunpack.c.h.b16 %v832
    %v1950 = vpack.c.b16 %v1312, %v1310
    %v1951 = vpack.c.b16 %v1313, %v1311
    %v1952 = vpack.c.b16 %v1316, %v1314
    %v1953 = vpack.c.b16 %v1317, %v1315
    %v1954 = vpack.c.b16 %v1320, %v1318
    %v1955 = vpack.c.b16 %v1321, %v1319
    %v1956 = vpack.c.b16 %v1324, %v1322
    %v1957 = vpack.c.b16 %v1325, %v1323
    %v1958 = vpack.c.b16 %v1328, %v1326
    %v1959 = vpack.c.b16 %v1329, %v1327
    %v1960 = vpack.c.b16 %v1332, %v1330
    %v1961 = vpack.c.b16 %v1333, %v1331
    %v1962 = vpack.c.b16 %v1336, %v1334
    %v1963 = vpack.c.b16 %v1337, %v1335
    %v1964 = vpack.c.b16 %v1340, %v1338
    %v1965 = vpack.c.b16 %v1341, %v1339
    %v1966 = vpack.c.b16 %v1344, %v1342
    %v1967 = vpack.c.b16 %v1345, %v1343
    %v1968 = vpack.c.b16 %v1348, %v1346
    %v1969 = vpack.c.b16 %v1349, %v1347
    %v1970 = vpack.c.b16 %v1352, %v1350
    %v1971 = vpack.c.b16 %v1353, %v1351
    %v1972 = vpack.c.b16 %v1356, %v1354
    %v1973 = vpack.c.b16 %v1357, %v1355
    %v1974 = vpack.c.b16 %v1360, %v1358
    %v1975 = vpack.c.b16 %v1361, %v1359
    %v1976 = vpack.c.b16 %v1364, %v1362
    %v1977 = vpack.c.b16 %v1365, %v1363
    %v1978 = vpack.c.b16 %v1368, %v1366
    %v1979 = vpack.c.b16 %v1369, %v1367
    %v1980 = vpack.c.b16 %v1372, %v1370
    %v1981 = vpack.c.b16 %v1373, %v1371
    %v1982 = vpack.c.b16 %v1376, %v1374
    %v1983 = vpack.c.b16 %v1377, %v1375
    %v1984 = vpack.c.b16 %v1380, %v1378
    %v1985 = vpack.c.b16 %v1381, %v1379
    %v1986 = vpack.c.b16 %v1384, %v1382
    %v1987 = vpack.c.b16 %v1385, %v1383
    %v1988 = vpack.c.b16 %v1388, %v1386
    %v1989 = vpack.c.b16 %v1389, %v1387
    %v1990 = vpack.c.b16 %v1392, %v1390
    %v1991 = vpack.c.b16 %v1393, %v1391
    %v1992 = vpack.c.b16 %v1396, %v1394
    %v1993 = vpack.c.b16 %v1397, %v1395
    %v1994 = vpack.c.b16 %v1400, %v1398
    %v1995 = vpack.c.b16 %v1401, %v1399
    %v1996 = vpack.c.b16 %v1404, %v1402
    %v1997 = vpack.c.b16 %v1405, %v1403
    %v1998 = vpack.c.b16 %v1408, %v1406
    %v1999 = vpack.c.b16 %v1409, %v1407
    %v2000 = vpack.c.b16 %v1412, %v1410
    %v2001 = vpack.c.b16 %v1413, %v1411
    %v2002 = vpack.c.b16 %v1416, %v1414
    %v2003 = vpack.c.b16 %v1417, %v1415
    %v2004 = vpack.c.b16 %v1420, %v1418
    %v2005 = vpack.c.b16 %v1421, %v1419
    %v2006 = vpack.c.b16 %v1424, %v1422
    %v2007 = vpack.c.b16 %v1425, %v1423
    %v2008 = vpack.c.b16 %v1428, %v1426
    %v2009 = vpack.c.b16 %v1429, %v1427
    %v2010 = vpack.c.b16 %v1432, %v1430
    %v2011 = vpack.c.b16 %v1433, %v1431
    %v2012 = vpack.c.b16 %v1436, %v1434
    %v2013 = vpack.c.b16 %v1437, %v1435
    %v2014 = vpack.c.b16 %v1440, %v1438
    %v2015 = vpack.c.b16 %v1441, %v1439
    %v2016 = vpack.c.b16 %v1444, %v1442
    %v2017 = vpack.c.b16 %v1445, %v1443
    %v2018 = vpack.c.b16 %v1448, %v1446
    %v2019 = vpack.c.b16 %v1449, %v1447
    %v2020 = vpack.c.b16 %v1452, %v1450
    %v2021 = vpack.c.b16 %v1453, %v1451
    %v2022 = vpack.c.b16 %v1456, %v1454
    %v2023 = vpack.c.b16 %v1457, %v1455
    %v2024 = vpack.c.b16 %v1460, %v1458
    %v2025 = vpack.c.b16 %v1461, %v1459
    %v2026 = vpack.c.b16 %v1464, %v1462
    %v2027 = vpack.c.b16 %v1465, %v1463
    %v2028 = vpack.c.b16 %v1468, %v1466
    %v2029 = vpack.c.b16 %v1469, %v1467
    %v2030 = vpack.c.b16 %v1472, %v1470
    %v2031 = vpack.c.b16 %v1473, %v1471
    %v2032 = vpack.c.b16 %v1476, %v1474
    %v2033 = vpack.c.b16 %v1477, %v1475
    %v2034 = vpack.c.b16 %v1480, %v1478
    %v2035 = vpack.c.b16 %v1481, %v1479
    %v2036 = vpack.c.b16 %v1484, %v1482
    %v2037 = vpack.c.b16 %v1485, %v1483
    %v2038 = vpack.c.b16 %v1488, %v1486
    %v2039 = vpack.c.b16 %v1489, %v1487
    %v2040 = vpack.c.b16 %v1492, %v1490
    %v2041 = vpack.c.b16 %v1493, %v1491
    %v2042 = vpack.c.b16 %v1496, %v1494
    %v2043 = vpack.c.b16 %v1497, %v1495
    %v2044 = vpack.c.b16 %v1500, %v1498
    %v2045 = vpack.c.b16 %v1501, %v1499
    %v2046 = vpack.c.b16 %v1504, %v1502
    %v2047 = vpack.c.b16 %v1505, %v1503
    %v2048 = vpack.c.b16 %v1508, %v1506
    %v2049 = vpack.c.b16 %v1509, %v1507
    %v2050 = vpack.c.b16 %v1512, %v1510
    %v2051 = vpack.c.b16 %v1513, %v1511
    %v2052 = vpack.c.b16 %v1516, %v1514
    %v2053 = vpack.c.b16 %v1517, %v1515
    %v2054 = vpack.c.b16 %v1520, %v1518
    %v2055 = vpack.c.b16 %v1521, %v1519
    %v2056 = vpack.c.b16 %v1524, %v1522
    %v2057 = vpack.c.b16 %v1525, %v1523
    %v2058 = vpack.c.b16 %v1528, %v1526
    %v2059 = vpack.c.b16 %v1529, %v1527
    %v2060 = vpack.c.b16 %v1532, %v1530
    %v2061 = vpack.c.b16 %v1533, %v1531
    %v2062 = vpack.c.b16 %v1536, %v1534
    %v2063 = vpack.c.b16 %v1537, %v1535
    %v2064 = vpack.c.b16 %v1540, %v1538
    %v2065 = vpack.c.b16 %v1541, %v1539
    %v2066 = vpack.c.b16 %v1544, %v1542
    %v2067 = vpack.c.b16 %v1545, %v1543
    %v2068 = vpack.c.b16 %v1548, %v1546
    %v2069 = vpack.c.b16 %v1549, %v1547
    %v2070 = vpack.c.b16 %v1552, %v1550
    %v2071 = vpack.c.b16 %v1553, %v1551
    %v2072 = vpack.c.b16 %v1556, %v1554
    %v2073 = vpack.c.b16 %v1557, %v1555
    %v2074 = vpack.c.b16 %v1560, %v1558
    %v2075 = vpack.c.b16 %v1561, %v1559
    %v2076 = vpack.c.b16 %v1564, %v1562
    %v2077 = vpack.c.b16 %v1565, %v1563
    %v2078 = vpack.c.b16 %v1568, %v1566
    %v2079 = vpack.c.b16 %v1569, %v1567
    %v2080 = vpack.c.b16 %v1572, %v1570
    %v2081 = vpack.c.b16 %v1573, %v1571
    %v2082 = vpack.c.b16 %v1576, %v1574
    %v2083 = vpack.c.b16 %v1577, %v1575
    %v2084 = vpack.c.b16 %v1580, %v1578
    %v2085 = vpack.c.b16 %v1581, %v1579
    %v2086 = vpack.c.b16 %v1584, %v1582
    %v2087 = vpack.c.b16 %v1585, %v1583
    %v2088 = vpack.c.b16 %v1588, %v1586
    %v2089 = vpack.c.b16 %v1589, %v1587
    %v2090 = vpack.c.b16 %v1592, %v1590
    %v2091 = vpack.c.b16 %v1593, %v1591
    %v2092 = vpack.c.b16 %v1596, %v1594
    %v2093 = vpack.c.b16 %v1597, %v1595
    %v2094 = vpack.c.b16 %v1600, %v1598
    %v2095 = vpack.c.b16 %v1601, %v1599
    %v2096 = vpack.c.b16 %v1604, %v1602
    %v2097 = vpack.c.b16 %v1605, %v1603
    %v2098 = vpack.c.b16 %v1608, %v1606
    %v2099 = vpack.c.b16 %v1609, %v1607
    %v2100 = vpack.c.b16 %v1612, %v1610
    %v2101 = vpack.c.b16 %v1613, %v1611
    %v2102 = vpack.c.b16 %v1616, %v1614
    %v2103 = vpack.c.b16 %v1617, %v1615
    %v2104 = vpack.c.b16 %v1620, %v1618
    %v2105 = vpack.c.b16 %v1621, %v1619
    %v2106 = vpack.c.b16 %v1624, %v1622
    %v2107 = vpack.c.b16 %v1625, %v1623
    %v2108 = vpack.c.b16 %v1628, %v1626
    %v2109 = vpack.c.b16 %v1629, %v1627
    %v2110 = vpack.c.b16 %v1632, %v1630
    %v2111 = vpack.c.b16 %v1633, %v1631
    %v2112 = vpack.c.b16 %v1636, %v1634
    %v2113 = vpack.c.b16 %v1637, %v1635
    %v2114 = vpack.c.b16 %v1640, %v1638
    %v2115 = vpack.c.b16 %v1641, %v1639
    %v2116 = vpack.c.b16 %v1644, %v1642
    %v2117 = vpack.c.b16 %v1645, %v1643
    %v2118 = vpack.c.b16 %v1648, %v1646
    %v2119 = vpack.c.b16 %v1649, %v1647
    %v2120 = vpack.c.b16 %v1652, %v1650
    %v2121 = vpack.c.b16 %v1653, %v1651
    %v2122 = vpack.c.b16 %v1656, %v1654
    %v2123 = vpack.c.b16 %v1657, %v1655
    %v2124 = vpack.c.b16 %v1660, %v1658
    %v2125 = vpack.c.b16 %v1661, %v1659
    %v2126 = vpack.c.b16 %v1664, %v1662
    %v2127 = vpack.c.b16 %v1665, %v1663
    %v2128 = vpack.c.b16 %v1668, %v1666
    %v2129 = vpack.c.b16 %v1669, %v1667
    %v2130 = vpack.c.b16 %v1672, %v1670
    %v2131 = vpack.c.b16 %v1673, %v1671
    %v2132 = vpack.c.b16 %v1676, %v1674
    %v2133 = vpack.c.b16 %v1677, %v1675
    %v2134 = vpack.c.b16 %v1680, %v1678
    %v2135 = vpack.c.b16 %v1681, %v1679
    %v2136 = vpack.c.b16 %v1684, %v1682
    %v2137 = vpack.c.b16 %v1685, %v1683
    %v2138 = vpack.c.b16 %v1688, %v1686
    %v2139 = vpack.c.b16 %v1689, %v1687
    %v2140 = vpack.c.b16 %v1692, %v1690
    %v2141 = vpack.c.b16 %v1693, %v1691
    %v2142 = vpack.c.b16 %v1696, %v1694
    %v2143 = vpack.c.b16 %v1697, %v1695
    %v2144 = vpack.c.b16 %v1700, %v1698
    %v2145 = vpack.c.b16 %v1701, %v1699
    %v2146 = vpack.c.b16 %v1704, %v1702
    %v2147 = vpack.c.b16 %v1705, %v1703
    %v2148 = vpack.c.b16 %v1708, %v1706
    %v2149 = vpack.c.b16 %v1709, %v1707
    %v2150 = vpack.c.b16 %v1712, %v1710
    %v2151 = vpack.c.b16 %v1713, %v1711
    %v2152 = vpack.c.b16 %v1716, %v1714
    %v2153 = vpack.c.b16 %v1717, %v1715
    %v2154 = vpack.c.b16 %v1720, %v1718
    %v2155 = vpack.c.b16 %v1721, %v1719
    %v2156 = vpack.c.b16 %v1724, %v1722
    %v2157 = vpack.c.b16 %v1725, %v1723
    %v2158 = vpack.c.b16 %v1728, %v1726
    %v2159 = vpack.c.b16 %v1729, %v1727
    %v2160 = vpack.c.b16 %v1732, %v1730
    %v2161 = vpack.c.b16 %v1733, %v1731
    %v2162 = vpack.c.b16 %v1736, %v1734
    %v2163 = vpack.c.b16 %v1737, %v1735
    %v2164 = vpack.c.b16 %v1740, %v1738
    %v2165 = vpack.c.b16 %v1741, %v1739
    %v2166 = vpack.c.b16 %v1744, %v1742
    %v2167 = vpack.c.b16 %v1745, %v1743
    %v2168 = vpack.c.b16 %v1748, %v1746
    %v2169 = vpack.c.b16 %v1749, %v1747
    %v2170 = vpack.c.b16 %v1752, %v1750
    %v2171 = vpack.c.b16 %v1753, %v1751
    %v2172 = vpack.c.b16 %v1756, %v1754
    %v2173 = vpack.c.b16 %v1757, %v1755
    %v2174 = vpack.c.b16 %v1760, %v1758
    %v2175 = vpack.c.b16 %v1761, %v1759
    %v2176 = vpack.c.b16 %v1764, %v1762
    %v2177 = vpack.c.b16 %v1765, %v1763
    %v2178 = vpack.c.b16 %v1768, %v1766
    %v2179 = vpack.c.b16 %v1769, %v1767
    %v2180 = vpack.c.b16 %v1772, %v1770
    %v2181 = vpack.c.b16 %v1773, %v1771
    %v2182 = vpack.c.b16 %v1776, %v1774
    %v2183 = vpack.c.b16 %v1777, %v1775
    %v2184 = vpack.c.b16 %v1780, %v1778
    %v2185 = vpack.c.b16 %v1781, %v1779
    %v2186 = vpack.c.b16 %v1784, %v1782
    %v2187 = vpack.c.b16 %v1785, %v1783
    %v2188 = vpack.c.b16 %v1788, %v1786
    %v2189 = vpack.c.b16 %v1789, %v1787
    %v2190 = vpack.c.b16 %v1792, %v1790
    %v2191 = vpack.c.b16 %v1793, %v1791
    %v2192 = vpack.c.b16 %v1796, %v1794
    %v2193 = vpack.c.b16 %v1797, %v1795
    %v2194 = vpack.c.b16 %v1800, %v1798
    %v2195 = vpack.c.b16 %v1801, %v1799
    %v2196 = vpack.c.b16 %v1804, %v1802
    %v2197 = vpack.c.b16 %v1805, %v1803
    %v2198 = vpack.c.b16 %v1808, %v1806
    %v2199 = vpack.c.b16 %v1809, %v1807
    %v2200 = vpack.c.b16 %v1812, %v1810
    %v2201 = vpack.c.b16 %v1813, %v1811
    %v2202 = vpack.c.b16 %v1816, %v1814
    %v2203 = vpack.c.b16 %v1817, %v1815
    %v2204 = vpack.c.b16 %v1820, %v1818
    %v2205 = vpack.c.b16 %v1821, %v1819
    %v2206 = vpack.c.b16 %v1824, %v1822
    %v2207 = vpack.c.b16 %v1825, %v1823
    %v2208 = vpack.c.b16 %v1828, %v1826
    %v2209 = vpack.c.b16 %v1829, %v1827
    %v2210 = vpack.c.b16 %v1832, %v1830
    %v2211 = vpack.c.b16 %v1833, %v1831
    %v2212 = vpack.c.b16 %v1836, %v1834
    %v2213 = vpack.c.b16 %v1837, %v1835
    %v2214 = vpack.c.b16 %v1840, %v1838
    %v2215 = vpack.c.b16 %v1841, %v1839
    %v2216 = vpack.c.b16 %v1844, %v1842
    %v2217 = vpack.c.b16 %v1845, %v1843
    %v2218 = vpack.c.b16 %v1848, %v1846
    %v2219 = vpack.c.b16 %v1849, %v1847
    %v2220 = vpack.c.b16 %v1852, %v1850
    %v2221 = vpack.c.b16 %v1853, %v1851
    %v2222 = vpack.c.b16 %v1856, %v1854
    %v2223 = vpack.c.b16 %v1857, %v1855
    %v2224 = vpack.c.b16 %v1860, %v1858
    %v2225 = vpack.c.b16 %v1861, %v1859
    %v2226 = vpack.c.b16 %v1864, %v1862
    %v2227 = vpack.c.b16 %v1865, %v1863
    %v2228 = vpack.c.b16 %v1868, %v1866
    %v2229 = vpack.c.b16 %v1869, %v1867
    %v2230 = vpack.c.b16 %v1872, %v1870
    %v2231 = vpack.c.b16 %v1873, %v1871
    %v2232 = vpack.c.b16 %v1876, %v1874
    %v2233 = vpack.c.b16 %v1877, %v1875
    %v2234 = vpack.c.b16 %v1880, %v1878
    %v2235 = vpack.c.b16 %v1881, %v1879
    %v2236 = vpack.c.b16 %v1884, %v1882
    %v2237 = vpack.c.b16 %v1885, %v1883
    %v2238 = vpack.c.b16 %v1888, %v1886
    %v2239 = vpack.c.b16 %v1889, %v1887
    %v2240 = vpack.c.b16 %v1892, %v1890
    %v2241 = vpack.c.b16 %v1893, %v1891
    %v2242 = vpack.c.b16 %v1896, %v1894
    %v2243 = vpack.c.b16 %v1897, %v1895
    %v2244 = vpack.c.b16 %v1900, %v1898
    %v2245 = vpack.c.b16 %v1901, %v1899
    %v2246 = vpack.c.b16 %v1904, %v1902
    %v2247 = vpack.c.b16 %v1905, %v1903
    %v2248 = vpack.c.b16 %v1908, %v1906
    %v2249 = vpack.c.b16 %v1909, %v1907
    %v2250 = vpack.c.b16 %v1912, %v1910
    %v2251 = vpack.c.b16 %v1913, %v1911
    %v2252 = vpack.c.b16 %v1916, %v1914
    %v2253 = vpack.c.b16 %v1917, %v1915
    %v2254 = vpack.c.b16 %v1920, %v1918
    %v2255 = vpack.c.b16 %v1921, %v1919
    %v2256 = vpack.c.b16 %v1924, %v1922
    %v2257 = vpack.c.b16 %v1925, %v1923
    %v2258 = vpack.c.b16 %v1928, %v1926
    %v2259 = vpack.c.b16 %v1929, %v1927
    %v2260 = vpack.c.b16 %v1932, %v1930
    %v2261 = vpack.c.b16 %v1933, %v1931
    %v2262 = vpack.c.b16 %v1936, %v1934
    %v2263 = vpack.c.b16 %v1937, %v1935
    %v2264 = vpack.c.b16 %v1940, %v1938
    %v2265 = vpack.c.b16 %v1941, %v1939
    %v2266 = vpack.c.b16 %v1944, %v1942
    %v2267 = vpack.c.b16 %v1945, %v1943
    %v2268 = vpack.c.b16 %v1948, %v1946
    %v2269 = vpack.c.b16 %v1949, %v1947
    %2590 = vmatprep.subr.bf16.mxu0 %v1965
    %2591 = vmatpush1.bf16.msra.mxu0 %v1964
    %2592 = vmatprep.subr.bf16.mxu0 %v1963
    %2593 = vmatpush1.bf16.msra.mxu0 %v1962
    %2594 = vmatprep.subr.bf16.mxu0 %v1961
    %2595 = vmatpush1.bf16.msra.mxu0 %v1960
    %2596 = vmatprep.subr.bf16.mxu0 %v1959
    %2597 = vmatpush1.bf16.msra.mxu0 %v1958
    %2598 = vmatprep.subr.bf16.mxu0 %v1957
    %2599 = vmatpush1.bf16.msra.mxu0 %v1956
    %2600 = vmatprep.subr.bf16.mxu0 %v1955
    %2601 = vmatpush1.bf16.msra.mxu0 %v1954
    %2602 = vmatprep.subr.bf16.mxu0 %v1953
    %2603 = vmatpush1.bf16.msra.mxu0 %v1952
    %2604 = vmatprep.subr.bf16.mxu0 %v1951
    %2605 = vmatpush1.bf16.msra.mxu0 %v1950
    %2606 = vmatprep.subr.bf16.mxu0 %v1981
    %2607 = vmatpush2.bf16.msra.mxu0 %v1980
    %2608 = vmatprep.subr.bf16.mxu0 %v1979
    %2609 = vmatpush2.bf16.msra.mxu0 %v1978
    %2610 = vmatprep.subr.bf16.mxu0 %v1977
    %2611 = vmatpush2.bf16.msra.mxu0 %v1976
    %2612 = vmatprep.subr.bf16.mxu0 %v1975
    %2613 = vmatpush2.bf16.msra.mxu0 %v1974
    %2614 = vmatprep.subr.bf16.mxu0 %v1973
    %2615 = vmatpush2.bf16.msra.mxu0 %v1972
    %2616 = vmatprep.subr.bf16.mxu0 %v1971
    %2617 = vmatpush2.bf16.msra.mxu0 %v1970
    %2618 = vmatprep.subr.bf16.mxu0 %v1969
    %2619 = vmatpush2.bf16.msra.mxu0 %v1968
    %2620 = vmatprep.subr.bf16.mxu0 %v1967
    %2621 = vmatpush2.bf16.msra.mxu0 %v1966
    %2622 = vmatprep.mubr.bf16.mxu0 %v885
    %2623 = vmatmul.mubr.bf16.gmra.mxu0 %v871
    %v2624 = vpop.f32.mrf.mxu0
    %v2625 = vadd.f32 %v838, %v2624
    %v2626 = vpop.f32.mrf.mxu0
    %v2627 = vadd.f32 %v842, %v2626
    %v2628 = vpop.f32.mrf.mxu0
    %v2629 = vpop.f32.mrf.mxu0
    %2630 = vdwg.mxu0
    %2631 = vmatprep.subr.bf16.mxu0 %v1997
    %2632 = vmatpush1.bf16.msra.mxu0 %v1996
    %2633 = vmatprep.subr.bf16.mxu0 %v1995
    %2634 = vmatpush1.bf16.msra.mxu0 %v1994
    %2635 = vmatprep.subr.bf16.mxu0 %v1993
    %2636 = vmatpush1.bf16.msra.mxu0 %v1992
    %2637 = vmatprep.subr.bf16.mxu0 %v1991
    %2638 = vmatpush1.bf16.msra.mxu0 %v1990
    %2639 = vmatprep.subr.bf16.mxu0 %v1989
    %2640 = vmatpush1.bf16.msra.mxu0 %v1988
    %2641 = vmatprep.subr.bf16.mxu0 %v1987
    %2642 = vmatpush1.bf16.msra.mxu0 %v1986
    %2643 = vmatprep.subr.bf16.mxu0 %v1985
    %2644 = vmatpush1.bf16.msra.mxu0 %v1984
    %2645 = vmatprep.subr.bf16.mxu0 %v1983
    %2646 = vmatpush1.bf16.msra.mxu0 %v1982
    %2647 = vmatprep.subr.bf16.mxu0 %v2013
    %2648 = vmatpush2.bf16.msra.mxu0 %v2012
    %2649 = vmatprep.subr.bf16.mxu0 %v2011
    %2650 = vmatpush2.bf16.msra.mxu0 %v2010
    %2651 = vmatprep.subr.bf16.mxu0 %v2009
    %2652 = vmatpush2.bf16.msra.mxu0 %v2008
    %2653 = vmatprep.subr.bf16.mxu0 %v2007
    %2654 = vmatpush2.bf16.msra.mxu0 %v2006
    %2655 = vmatprep.subr.bf16.mxu0 %v2005
    %2656 = vmatpush2.bf16.msra.mxu0 %v2004
    %2657 = vmatprep.subr.bf16.mxu0 %v2003
    %2658 = vmatpush2.bf16.msra.mxu0 %v2002
    %2659 = vmatprep.subr.bf16.mxu0 %v2001
    %2660 = vmatpush2.bf16.msra.mxu0 %v2000
    %2661 = vmatprep.subr.bf16.mxu0 %v1999
    %2662 = vmatpush2.bf16.msra.mxu0 %v1998
    %2663 = vmatprep.mubr.bf16.mxu0 %v895
    %2664 = vmatmul.mubr.bf16.gmra.mxu0 %v893
    %v2665 = vpop.f32.mrf.mxu0
    %v2666 = vadd.f32 %v2625, %v2665
    %v2667 = vpop.f32.mrf.mxu0
    %v2668 = vadd.f32 %v2627, %v2667
    %v2669 = vpop.f32.mrf.mxu0
    %v2670 = vpop.f32.mrf.mxu0
    %2671 = vdwg.mxu0
    %2672 = vmatprep.subr.bf16.mxu0 %v2029
    %2673 = vmatpush1.bf16.msra.mxu0 %v2028
    %2674 = vmatprep.subr.bf16.mxu0 %v2027
    %2675 = vmatpush1.bf16.msra.mxu0 %v2026
    %2676 = vmatprep.subr.bf16.mxu0 %v2025
    %2677 = vmatpush1.bf16.msra.mxu0 %v2024
    %2678 = vmatprep.subr.bf16.mxu0 %v2023
    %2679 = vmatpush1.bf16.msra.mxu0 %v2022
    %2680 = vmatprep.subr.bf16.mxu0 %v2021
    %2681 = vmatpush1.bf16.msra.mxu0 %v2020
    %2682 = vmatprep.subr.bf16.mxu0 %v2019
    %2683 = vmatpush1.bf16.msra.mxu0 %v2018
    %2684 = vmatprep.subr.bf16.mxu0 %v2017
    %2685 = vmatpush1.bf16.msra.mxu0 %v2016
    %2686 = vmatprep.subr.bf16.mxu0 %v2015
    %2687 = vmatpush1.bf16.msra.mxu0 %v2014
    %2688 = vmatprep.subr.bf16.mxu0 %v2045
    %2689 = vmatpush2.bf16.msra.mxu0 %v2044
    %2690 = vmatprep.subr.bf16.mxu0 %v2043
    %2691 = vmatpush2.bf16.msra.mxu0 %v2042
    %2692 = vmatprep.subr.bf16.mxu0 %v2041
    %2693 = vmatpush2.bf16.msra.mxu0 %v2040
    %2694 = vmatprep.subr.bf16.mxu0 %v2039
    %2695 = vmatpush2.bf16.msra.mxu0 %v2038
    %2696 = vmatprep.subr.bf16.mxu0 %v2037
    %2697 = vmatpush2.bf16.msra.mxu0 %v2036
    %2698 = vmatprep.subr.bf16.mxu0 %v2035
    %2699 = vmatpush2.bf16.msra.mxu0 %v2034
    %2700 = vmatprep.subr.bf16.mxu0 %v2033
    %2701 = vmatpush2.bf16.msra.mxu0 %v2032
    %2702 = vmatprep.subr.bf16.mxu0 %v2031
    %2703 = vmatpush2.bf16.msra.mxu0 %v2030
    %2704 = vmatprep.mubr.bf16.mxu0 %v892
    %2705 = vmatmul.mubr.bf16.gmra.mxu0 %v878
    %v2706 = vpop.f32.mrf.mxu0
    %v2707 = vadd.f32 %v2666, %v2706
    %v2708 = vpop.f32.mrf.mxu0
    %v2709 = vadd.f32 %v2668, %v2708
    %v2710 = vpop.f32.mrf.mxu0
    %v2711 = vpop.f32.mrf.mxu0
    %2712 = vdwg.mxu0
    %2713 = vmatprep.subr.bf16.mxu0 %v2061
    %2714 = vmatpush1.bf16.msra.mxu0 %v2060
    %2715 = vmatprep.subr.bf16.mxu0 %v2059
    %2716 = vmatpush1.bf16.msra.mxu0 %v2058
    %2717 = vmatprep.subr.bf16.mxu0 %v2057
    %2718 = vmatpush1.bf16.msra.mxu0 %v2056
    %2719 = vmatprep.subr.bf16.mxu0 %v2055
    %2720 = vmatpush1.bf16.msra.mxu0 %v2054
    %2721 = vmatprep.subr.bf16.mxu0 %v2053
    %2722 = vmatpush1.bf16.msra.mxu0 %v2052
    %2723 = vmatprep.subr.bf16.mxu0 %v2051
    %2724 = vmatpush1.bf16.msra.mxu0 %v2050
    %2725 = vmatprep.subr.bf16.mxu0 %v2049
    %2726 = vmatpush1.bf16.msra.mxu0 %v2048
    %2727 = vmatprep.subr.bf16.mxu0 %v2047
    %2728 = vmatpush1.bf16.msra.mxu0 %v2046
    %2729 = vmatprep.subr.bf16.mxu0 %v2077
    %2730 = vmatpush2.bf16.msra.mxu0 %v2076
    %2731 = vmatprep.subr.bf16.mxu0 %v2075
    %2732 = vmatpush2.bf16.msra.mxu0 %v2074
    %2733 = vmatprep.subr.bf16.mxu0 %v2073
    %2734 = vmatpush2.bf16.msra.mxu0 %v2072
    %2735 = vmatprep.subr.bf16.mxu0 %v2071
    %2736 = vmatpush2.bf16.msra.mxu0 %v2070
    %2737 = vmatprep.subr.bf16.mxu0 %v2069
    %2738 = vmatpush2.bf16.msra.mxu0 %v2068
    %2739 = vmatprep.subr.bf16.mxu0 %v2067
    %2740 = vmatpush2.bf16.msra.mxu0 %v2066
    %2741 = vmatprep.subr.bf16.mxu0 %v2065
    %2742 = vmatpush2.bf16.msra.mxu0 %v2064
    %2743 = vmatprep.subr.bf16.mxu0 %v2063
    %2744 = vmatpush2.bf16.msra.mxu0 %v2062
    %2745 = vmatprep.mubr.bf16.mxu0 %v896
    %2746 = vmatmul.mubr.bf16.gmra.mxu0 %v894
    %v2747 = vpop.f32.mrf.mxu0
    %v2748 = vadd.f32 %v2707, %v2747
    %v2749 = vpop.f32.mrf.mxu0
    %v2750 = vadd.f32 %v2709, %v2749
    %v2751 = vpop.f32.mrf.mxu0
    %v2752 = vpop.f32.mrf.mxu0
    %2753 = vdwg.mxu0
    %2754 = vmatprep.subr.bf16.mxu0 %v2093
    %2755 = vmatpush1.bf16.msra.mxu0 %v2092
    %2756 = vmatprep.subr.bf16.mxu0 %v2091
    %2757 = vmatpush1.bf16.msra.mxu0 %v2090
    %2758 = vmatprep.subr.bf16.mxu0 %v2089
    %2759 = vmatpush1.bf16.msra.mxu0 %v2088
    %2760 = vmatprep.subr.bf16.mxu0 %v2087
    %2761 = vmatpush1.bf16.msra.mxu0 %v2086
    %2762 = vmatprep.subr.bf16.mxu0 %v2085
    %2763 = vmatpush1.bf16.msra.mxu0 %v2084
    %2764 = vmatprep.subr.bf16.mxu0 %v2083
    %2765 = vmatpush1.bf16.msra.mxu0 %v2082
    %2766 = vmatprep.subr.bf16.mxu0 %v2081
    %2767 = vmatpush1.bf16.msra.mxu0 %v2080
    %2768 = vmatprep.subr.bf16.mxu0 %v2079
    %2769 = vmatpush1.bf16.msra.mxu0 %v2078
    %2770 = vmatprep.subr.bf16.mxu0 %v2109
    %2771 = vmatpush2.bf16.msra.mxu0 %v2108
    %2772 = vmatprep.subr.bf16.mxu0 %v2107
    %2773 = vmatpush2.bf16.msra.mxu0 %v2106
    %2774 = vmatprep.subr.bf16.mxu0 %v2105
    %2775 = vmatpush2.bf16.msra.mxu0 %v2104
    %2776 = vmatprep.subr.bf16.mxu0 %v2103
    %2777 = vmatpush2.bf16.msra.mxu0 %v2102
    %2778 = vmatprep.subr.bf16.mxu0 %v2101
    %2779 = vmatpush2.bf16.msra.mxu0 %v2100
    %2780 = vmatprep.subr.bf16.mxu0 %v2099
    %2781 = vmatpush2.bf16.msra.mxu0 %v2098
    %2782 = vmatprep.subr.bf16.mxu0 %v2097
    %2783 = vmatpush2.bf16.msra.mxu0 %v2096
    %2784 = vmatprep.subr.bf16.mxu0 %v2095
    %2785 = vmatpush2.bf16.msra.mxu0 %v2094
    %2786 = vmatprep.mubr.bf16.mxu0 %v934
    %2787 = vmatmul.mubr.bf16.gmra.mxu0 %v920
    %v2788 = vpop.f32.mrf.mxu0
    %v2789 = vadd.f32 %v2748, %v2788
    %v2790 = vpop.f32.mrf.mxu0
    %v2791 = vadd.f32 %v2750, %v2790
    %v2792 = vpop.f32.mrf.mxu0
    %v2793 = vpop.f32.mrf.mxu0
    %2794 = vdwg.mxu0
    %2795 = vmatprep.subr.bf16.mxu0 %v2125
    %2796 = vmatpush1.bf16.msra.mxu0 %v2124
    %2797 = vmatprep.subr.bf16.mxu0 %v2123
    %2798 = vmatpush1.bf16.msra.mxu0 %v2122
    %2799 = vmatprep.subr.bf16.mxu0 %v2121
    %2800 = vmatpush1.bf16.msra.mxu0 %v2120
    %2801 = vmatprep.subr.bf16.mxu0 %v2119
    %2802 = vmatpush1.bf16.msra.mxu0 %v2118
    %2803 = vmatprep.subr.bf16.mxu0 %v2117
    %2804 = vmatpush1.bf16.msra.mxu0 %v2116
    %2805 = vmatprep.subr.bf16.mxu0 %v2115
    %2806 = vmatpush1.bf16.msra.mxu0 %v2114
    %2807 = vmatprep.subr.bf16.mxu0 %v2113
    %2808 = vmatpush1.bf16.msra.mxu0 %v2112
    %2809 = vmatprep.subr.bf16.mxu0 %v2111
    %2810 = vmatpush1.bf16.msra.mxu0 %v2110
    %2811 = vmatprep.subr.bf16.mxu0 %v2141
    %2812 = vmatpush2.bf16.msra.mxu0 %v2140
    %2813 = vmatprep.subr.bf16.mxu0 %v2139
    %2814 = vmatpush2.bf16.msra.mxu0 %v2138
    %2815 = vmatprep.subr.bf16.mxu0 %v2137
    %2816 = vmatpush2.bf16.msra.mxu0 %v2136
    %2817 = vmatprep.subr.bf16.mxu0 %v2135
    %2818 = vmatpush2.bf16.msra.mxu0 %v2134
    %2819 = vmatprep.subr.bf16.mxu0 %v2133
    %2820 = vmatpush2.bf16.msra.mxu0 %v2132
    %2821 = vmatprep.subr.bf16.mxu0 %v2131
    %2822 = vmatpush2.bf16.msra.mxu0 %v2130
    %2823 = vmatprep.subr.bf16.mxu0 %v2129
    %2824 = vmatpush2.bf16.msra.mxu0 %v2128
    %2825 = vmatprep.subr.bf16.mxu0 %v2127
    %2826 = vmatpush2.bf16.msra.mxu0 %v2126
    %2827 = vmatprep.mubr.bf16.mxu0 %v944
    %2828 = vmatmul.mubr.bf16.gmra.mxu0 %v942
    %v2829 = vpop.f32.mrf.mxu0
    %v2830 = vadd.f32 %v2789, %v2829
    %v2831 = vpop.f32.mrf.mxu0
    %v2832 = vadd.f32 %v2791, %v2831
    %v2833 = vpop.f32.mrf.mxu0
    %v2834 = vpop.f32.mrf.mxu0
    %2835 = vdwg.mxu0
    %2836 = vmatprep.subr.bf16.mxu0 %v2157
    %2837 = vmatpush1.bf16.msra.mxu0 %v2156
    %2838 = vmatprep.subr.bf16.mxu0 %v2155
    %2839 = vmatpush1.bf16.msra.mxu0 %v2154
    %2840 = vmatprep.subr.bf16.mxu0 %v2153
    %2841 = vmatpush1.bf16.msra.mxu0 %v2152
    %2842 = vmatprep.subr.bf16.mxu0 %v2151
    %2843 = vmatpush1.bf16.msra.mxu0 %v2150
    %2844 = vmatprep.subr.bf16.mxu0 %v2149
    %2845 = vmatpush1.bf16.msra.mxu0 %v2148
    %2846 = vmatprep.subr.bf16.mxu0 %v2147
    %2847 = vmatpush1.bf16.msra.mxu0 %v2146
    %2848 = vmatprep.subr.bf16.mxu0 %v2145
    %2849 = vmatpush1.bf16.msra.mxu0 %v2144
    %2850 = vmatprep.subr.bf16.mxu0 %v2143
    %2851 = vmatpush1.bf16.msra.mxu0 %v2142
    %2852 = vmatprep.subr.bf16.mxu0 %v2173
    %2853 = vmatpush2.bf16.msra.mxu0 %v2172
    %2854 = vmatprep.subr.bf16.mxu0 %v2171
    %2855 = vmatpush2.bf16.msra.mxu0 %v2170
    %2856 = vmatprep.subr.bf16.mxu0 %v2169
    %2857 = vmatpush2.bf16.msra.mxu0 %v2168
    %2858 = vmatprep.subr.bf16.mxu0 %v2167
    %2859 = vmatpush2.bf16.msra.mxu0 %v2166
    %2860 = vmatprep.subr.bf16.mxu0 %v2165
    %2861 = vmatpush2.bf16.msra.mxu0 %v2164
    %2862 = vmatprep.subr.bf16.mxu0 %v2163
    %2863 = vmatpush2.bf16.msra.mxu0 %v2162
    %2864 = vmatprep.subr.bf16.mxu0 %v2161
    %2865 = vmatpush2.bf16.msra.mxu0 %v2160
    %2866 = vmatprep.subr.bf16.mxu0 %v2159
    %2867 = vmatpush2.bf16.msra.mxu0 %v2158
    %2868 = vmatprep.mubr.bf16.mxu0 %v941
    %2869 = vmatmul.mubr.bf16.gmra.mxu0 %v927
    %v2870 = vpop.f32.mrf.mxu0
    %v2871 = vadd.f32 %v2830, %v2870
    %v2872 = vpop.f32.mrf.mxu0
    %v2873 = vadd.f32 %v2832, %v2872
    %v2874 = vpop.f32.mrf.mxu0
    %v2875 = vpop.f32.mrf.mxu0
    %2876 = vdwg.mxu0
    %2877 = vmatprep.subr.bf16.mxu0 %v2189
    %2878 = vmatpush1.bf16.msra.mxu0 %v2188
    %2879 = vmatprep.subr.bf16.mxu0 %v2187
    %2880 = vmatpush1.bf16.msra.mxu0 %v2186
    %2881 = vmatprep.subr.bf16.mxu0 %v2185
    %2882 = vmatpush1.bf16.msra.mxu0 %v2184
    %2883 = vmatprep.subr.bf16.mxu0 %v2183
    %2884 = vmatpush1.bf16.msra.mxu0 %v2182
    %2885 = vmatprep.subr.bf16.mxu0 %v2181
    %2886 = vmatpush1.bf16.msra.mxu0 %v2180
    %2887 = vmatprep.subr.bf16.mxu0 %v2179
    %2888 = vmatpush1.bf16.msra.mxu0 %v2178
    %2889 = vmatprep.subr.bf16.mxu0 %v2177
    %2890 = vmatpush1.bf16.msra.mxu0 %v2176
    %2891 = vmatprep.subr.bf16.mxu0 %v2175
    %2892 = vmatpush1.bf16.msra.mxu0 %v2174
    %2893 = vmatprep.subr.bf16.mxu0 %v2205
    %2894 = vmatpush2.bf16.msra.mxu0 %v2204
    %2895 = vmatprep.subr.bf16.mxu0 %v2203
    %2896 = vmatpush2.bf16.msra.mxu0 %v2202
    %2897 = vmatprep.subr.bf16.mxu0 %v2201
    %2898 = vmatpush2.bf16.msra.mxu0 %v2200
    %2899 = vmatprep.subr.bf16.mxu0 %v2199
    %2900 = vmatpush2.bf16.msra.mxu0 %v2198
    %2901 = vmatprep.subr.bf16.mxu0 %v2197
    %2902 = vmatpush2.bf16.msra.mxu0 %v2196
    %2903 = vmatprep.subr.bf16.mxu0 %v2195
    %2904 = vmatpush2.bf16.msra.mxu0 %v2194
    %2905 = vmatprep.subr.bf16.mxu0 %v2193
    %2906 = vmatpush2.bf16.msra.mxu0 %v2192
    %2907 = vmatprep.subr.bf16.mxu0 %v2191
    %2908 = vmatpush2.bf16.msra.mxu0 %v2190
    %2909 = vmatprep.mubr.bf16.mxu0 %v945
    %2910 = vmatmul.mubr.bf16.gmra.mxu0 %v943
    %v2911 = vpop.f32.mrf.mxu0
    %v2912 = vadd.f32 %v2871, %v2911
    %v2913 = vpop.f32.mrf.mxu0
    %v2914 = vadd.f32 %v2873, %v2913
    %v2915 = vpop.f32.mrf.mxu0
    %v2916 = vpop.f32.mrf.mxu0
    %2917 = vdwg.mxu0
    %2918 = vmatprep.subr.bf16.mxu0 %v2221
    %2919 = vmatpush1.bf16.msra.mxu0 %v2220
    %2920 = vmatprep.subr.bf16.mxu0 %v2219
    %2921 = vmatpush1.bf16.msra.mxu0 %v2218
    %2922 = vmatprep.subr.bf16.mxu0 %v2217
    %2923 = vmatpush1.bf16.msra.mxu0 %v2216
    %2924 = vmatprep.subr.bf16.mxu0 %v2215
    %2925 = vmatpush1.bf16.msra.mxu0 %v2214
    %2926 = vmatprep.subr.bf16.mxu0 %v2213
    %2927 = vmatpush1.bf16.msra.mxu0 %v2212
    %2928 = vmatprep.subr.bf16.mxu0 %v2211
    %2929 = vmatpush1.bf16.msra.mxu0 %v2210
    %2930 = vmatprep.subr.bf16.mxu0 %v2209
    %2931 = vmatpush1.bf16.msra.mxu0 %v2208
    %2932 = vmatprep.subr.bf16.mxu0 %v2207
    %2933 = vmatpush1.bf16.msra.mxu0 %v2206
    %2934 = vmatprep.subr.bf16.mxu0 %v2237
    %2935 = vmatpush2.bf16.msra.mxu0 %v2236
    %2936 = vmatprep.subr.bf16.mxu0 %v2235
    %2937 = vmatpush2.bf16.msra.mxu0 %v2234
    %2938 = vmatprep.subr.bf16.mxu0 %v2233
    %2939 = vmatpush2.bf16.msra.mxu0 %v2232
    %2940 = vmatprep.subr.bf16.mxu0 %v2231
    %2941 = vmatpush2.bf16.msra.mxu0 %v2230
    %2942 = vmatprep.subr.bf16.mxu0 %v2229
    %2943 = vmatpush2.bf16.msra.mxu0 %v2228
    %2944 = vmatprep.subr.bf16.mxu0 %v2227
    %2945 = vmatpush2.bf16.msra.mxu0 %v2226
    %2946 = vmatprep.subr.bf16.mxu0 %v2225
    %2947 = vmatpush2.bf16.msra.mxu0 %v2224
    %2948 = vmatprep.subr.bf16.mxu0 %v2223
    %2949 = vmatpush2.bf16.msra.mxu0 %v2222
    %2950 = vmatprep.mubr.bf16.mxu0 %v967
    %2951 = vmatmul.mubr.bf16.gmra.mxu0 %v960
    %v2952 = vpop.f32.mrf.mxu0
    %v2953 = vadd.f32 %v2912, %v2952
    %v2954 = vpop.f32.mrf.mxu0
    %v2955 = vadd.f32 %v2914, %v2954
    %v2956 = vpop.f32.mrf.mxu0
    %v2957 = vpop.f32.mrf.mxu0
    %2958 = vdwg.mxu0
    %2959 = vmatprep.subr.bf16.mxu0 %v2253
    %2960 = vmatpush1.bf16.msra.mxu0 %v2252
    %2961 = vmatprep.subr.bf16.mxu0 %v2251
    %2962 = vmatpush1.bf16.msra.mxu0 %v2250
    %2963 = vmatprep.subr.bf16.mxu0 %v2249
    %2964 = vmatpush1.bf16.msra.mxu0 %v2248
    %2965 = vmatprep.subr.bf16.mxu0 %v2247
    %2966 = vmatpush1.bf16.msra.mxu0 %v2246
    %2967 = vmatprep.subr.bf16.mxu0 %v2245
    %2968 = vmatpush1.bf16.msra.mxu0 %v2244
    %2969 = vmatprep.subr.bf16.mxu0 %v2243
    %2970 = vmatpush1.bf16.msra.mxu0 %v2242
    %2971 = vmatprep.subr.bf16.mxu0 %v2241
    %2972 = vmatpush1.bf16.msra.mxu0 %v2240
    %2973 = vmatprep.subr.bf16.mxu0 %v2239
    %2974 = vmatpush1.bf16.msra.mxu0 %v2238
    %2975 = vmatprep.subr.bf16.mxu0 %v2269
    %2976 = vmatpush2.bf16.msra.mxu0 %v2268
    %2977 = vmatprep.subr.bf16.mxu0 %v2267
    %2978 = vmatpush2.bf16.msra.mxu0 %v2266
    %2979 = vmatprep.subr.bf16.mxu0 %v2265
    %2980 = vmatpush2.bf16.msra.mxu0 %v2264
    %2981 = vmatprep.subr.bf16.mxu0 %v2263
    %2982 = vmatpush2.bf16.msra.mxu0 %v2262
    %2983 = vmatprep.subr.bf16.mxu0 %v2261
    %2984 = vmatpush2.bf16.msra.mxu0 %v2260
    %2985 = vmatprep.subr.bf16.mxu0 %v2259
    %2986 = vmatpush2.bf16.msra.mxu0 %v2258
    %2987 = vmatprep.subr.bf16.mxu0 %v2257
    %2988 = vmatpush2.bf16.msra.mxu0 %v2256
    %2989 = vmatprep.subr.bf16.mxu0 %v2255
    %2990 = vmatpush2.bf16.msra.mxu0 %v2254
    %2991 = vmatprep.mubr.bf16.mxu0 %v969
    %2992 = vmatmul.mubr.bf16.gmra.mxu0 %v968
    %v2993 = vpop.f32.mrf.mxu0
    %v2994 = vadd.f32 %v2953, %v2993
    %v2995 = vpop.f32.mrf.mxu0
    %v2996 = vadd.f32 %v2955, %v2995
    %v2997 = vpop.f32.mrf.mxu0
    %v2998 = vpop.f32.mrf.mxu0
    %2999 = vdwg.mxu0
    %v3000 = vsub.f32 0.0, %v2994
    %v3001 = vsub.f32 0.0, %v2996
    %v3002 = vmul.f32 %v3000, 1.442695
    %v3003 = vpow.pop %v3002
    %v3004 = vmul.f32 %v3001, 1.442695
    %v3005 = vpow.pop %v3004
    %v3006 = vadd.f32 %v3003, 1.0
    %v3007 = vadd.f32 %v3005, 1.0
    %v3008 = vrcp.pop %v3006
    %v3009 = vrcp.pop %v3007
    %v3010 = vmin.f32 %v3008, 1.0
    %v3011 = vmin.f32 %v3009, 1.0
    %v3014 = vcombine.low %v3010, %v3011
    %v3016 = vunpack.c.l.s4 1983009808
    %v3017 = vunpack.c.0.s8 %v3016
    %v3018 = vlaneseq
    %v3019 = vshrl.u32 %v3018, 7
    %v3020 = vsub.s32 %v3017, %v3019
    %v3021 = vrot.slane %v3014, %v3020
    %3023 = vst [vmem:[#allocation14] sm:$0xf] %v3021
    // Predicated region
    $region58: #{mynet_forward.1} parent=1 // pred_check
      _
    $region59: #{mynet_forward.1} parent=1 // pred_check_branch
      %3025 = sbr.rel (0) target = $region61
    $region60: #{mynet_forward.1} parent=1 // pred_region
      %s3027 = ssub.s32 64, 64
      %3028 = vsyncadd [#allocation5], %s3027
      %s3030 = sshll.u32 [#allocation14], 4
      %s3031 = int_to_ptr.vmem [resolvable:$true] %s3030
      %3033 = dma.vmem_to_hbm [thread:$0]  %s3031, 64, %s7, [#allocation5]
    $region61: #{mynet_forward.1} parent=1 // pred_fallthru
      _
    // Predicated region
    $region62: #{mynet_forward.1} parent=1 // pred_check
      _
    $region63: #{mynet_forward.1} parent=1 // pred_check_branch
      %3035 = sbr.rel (0) target = $region65
    $region64: #{mynet_forward.1} parent=1 // pred_region
      %3036 = dma.done [#allocation5], 64
    $region65: #{mynet_forward.1} parent=1 // pred_fallthru
      _
    %3037 = vsyncpa [#allocation4], 1
    %3038 = vsyncpa [#allocation7], 1
    %3039 = vsyncpa [#allocation10], 1
    %3040 = vsyncpa [#allocation13], 1
    %3041 = vsyncpa [#allocation5], 1

</llo_original>
